<compile_context>
chip_gen: v5e
topology: v5e:2x2
jax: 0.10.0
libtpu: 0.0.40
codegen_flags: <defaults>
</compile_context>

<pallas_src>
import math
from functools import partial
from typing import NamedTuple

import numpy as np
import jax
import jax.numpy as jnp
from jax import lax
from jax.experimental import pallas as pl
from jax.experimental.pallas import tpu as pltpu


# -----------------------------------------------------------------------------
# Pallas matmul kernels: fused bias + activation (+ optional residual add)
# -----------------------------------------------------------------------------
def _apply_act(r, act):
    if act == 'lrelu':
        return jnp.where(r >= 0, r, 0.1 * r)
    if act == 'relu':
        return jnp.maximum(r, 0.0)
    return r


def _make_kernel(act, has_res, multi_k):
    """Kernel factory.  Epilogue: o = act(acc + bias) [+ residual] (all in f32)."""
    if multi_k:
        def kern(a_ref, b_ref, bias_ref, *rest):
            if has_res:
                res_ref, o_ref, acc_ref = rest
            else:
                o_ref, acc_ref = rest

            @pl.when(pl.program_id(2) == 0)
            def _():
                acc_ref[...] = jnp.zeros_like(acc_ref)

            acc_ref[...] += jnp.dot(a_ref[...], b_ref[...],
                                    preferred_element_type=jnp.float32)

            @pl.when(pl.program_id(2) == pl.num_programs(2) - 1)
            def _():
                r = _apply_act(acc_ref[...] + bias_ref[...], act)
                if has_res:
                    r = r + res_ref[...].astype(jnp.float32)
                o_ref[...] = r.astype(o_ref.dtype)
    else:
        def kern(a_ref, b_ref, bias_ref, *rest):
            if has_res:
                res_ref, o_ref = rest
            else:
                (o_ref,) = rest
            r = jnp.dot(a_ref[...], b_ref[...],
                        preferred_element_type=jnp.float32) + bias_ref[...]
            r = _apply_act(r, act)
            if has_res:
                r = r + res_ref[...].astype(jnp.float32)
            o_ref[...] = r.astype(o_ref.dtype)
    return kern


def _round_up(x, m):
    return ((x + m - 1) // m) * m


_K_SINGLE_MAX = 2048


def _k_plan(K):
    """(Kp, tk): padded contraction length and K-tile.  tk == Kp -> single K step."""
    Kp = _round_up(K, 32)
    if Kp <= _K_SINGLE_MAX:
        return Kp, Kp
    Kp = _round_up(K, 128)
    tk = 512
    while Kp % tk:
        tk -= 128
    return Kp, tk


def _choose_tm(M):
    if M <= 256:
        return max(_round_up(M, 16), 16)
    if M <= 1024:
        return 256
    gm512 = -(-M // 512)
    if gm512 % 2 == 1 and M <= 8192:
        return 256          # keep the parallel grid even for dual-TensorCore chips
    return 512


@partial(jax.jit, static_argnames=('act', 'out_dtype'))
def matmul_bias_act(a, b, bias, act='none', out_dtype=jnp.float32, residual=None):
    """out = act(a @ b + bias) [+ residual].  a:(M,Kp or K), b:(K,N), bias:(N,).
    MXU runs in bf16, accumulation + epilogue in f32.  Only K is zero-padded;
    M and N use partial trailing blocks (OOB values never reach valid outputs)."""
    M, Ka = a.shape
    K, N = b.shape
    Kp, tk = _k_plan(K)
    if Ka < Kp:                                   # generic fallback (conv pre-pads in its concat)
        a = jnp.pad(a, ((0, 0), (0, Kp - Ka)))
    if K < Kp:                                    # weights are tiny; pad per call
        b = jnp.pad(b, ((0, Kp - K), (0, 0)))
    a = a.astype(jnp.bfloat16)
    b = b.astype(jnp.bfloat16)
    bias2d = bias.astype(jnp.float32).reshape(1, N)

    multi_k = tk != Kp
    tm = _choose_tm(M)
    Nr = _round_up(N, 128)
    tn = Nr if Nr <= 1024 else 512
    gm = -(-M // tm)
    gn = -(-N // tn)
    gk = Kp // tk

    if multi_k:
        grid = (gm, gn, gk)
        in_specs = [pl.BlockSpec((tm, tk), lambda i, j, k: (i, k)),
                    pl.BlockSpec((tk, tn), lambda i, j, k: (k, j)),
                    pl.BlockSpec((1, tn), lambda i, j, k: (0, j))]
        res_spec = pl.BlockSpec((tm, tn), lambda i, j, k: (i, j))
        out_spec = pl.BlockSpec((tm, tn), lambda i, j, k: (i, j))
        scratch = [pltpu.VMEM((tm, tn), jnp.float32)]
        dims = ("parallel", "parallel", "arbitrary")
    else:
        grid = (gm, gn)
        in_specs = [pl.BlockSpec((tm, tk), lambda i, j: (i, 0)),
                    pl.BlockSpec((tk, tn), lambda i, j: (0, j)),
                    pl.BlockSpec((1, tn), lambda i, j: (0, j))]
        res_spec = pl.BlockSpec((tm, tn), lambda i, j: (i, j))
        out_spec = pl.BlockSpec((tm, tn), lambda i, j: (i, j))
        scratch = []
        dims = ("parallel", "parallel")

    has_res = residual is not None
    operands = [a, b, bias2d]
    if has_res:
        in_specs = in_specs + [res_spec]
        operands.append(residual)

    out = pl.pallas_call(
        _make_kernel(act, has_res, multi_k),
        out_shape=jax.ShapeDtypeStruct((M, N), out_dtype),
        grid_spec=pltpu.PrefetchScalarGridSpec(
            num_scalar_prefetch=0,
            grid=grid,
            in_specs=in_specs,
            out_specs=out_spec,
            scratch_shapes=scratch),
        compiler_params=pltpu.CompilerParams(
            dimension_semantics=dims,
            vmem_limit_bytes=40 * 1024 * 1024),
    )(*operands)
    return out


# -----------------------------------------------------------------------------
# Conv2d (NHWC im2col in JAX, GEMM in Pallas) + small helpers
# -----------------------------------------------------------------------------
class ConvParams(NamedTuple):
    wmat: jax.Array    # (kh*kw*Cin, Cout), bf16, row order = (dy, dx, cin)
    bias: jax.Array    # (Cout,), f32
    k: int


@partial(jax.jit, static_argnames=('k', 'stride', 'padding', 'act', 'out_dtype'))
def _conv2d_impl(x, wmat, bias, residual, k, stride, padding, act, out_dtype):
    N, H, W, C = x.shape
    Cout = wmat.shape[1]
    xb = x.astype(jnp.bfloat16)
    if padding > 0:
        xb = jnp.pad(xb, ((0, 0), (padding, padding), (padding, padding), (0, 0)))
    Ho = (H + 2 * padding - k) // stride + 1
    Wo = (W + 2 * padding - k) // stride + 1
    K = k * k * C
    Kp, _ = _k_plan(K)
    # TODO(synk): im2col still materializes k*k copies of the activation in HBM;
    # an implicit-GEMM Pallas conv (tap axis in the grid, halo DMA) would avoid it.
    if k == 1 and stride == 1:
        pieces = [xb]
    else:
        pieces = [xb[:, dy:dy + stride * (Ho - 1) + 1:stride,
                     dx:dx + stride * (Wo - 1) + 1:stride, :]
                  for dy in range(k) for dx in range(k)]
    if Kp > K:  # K-padding fused into the concat (no extra pass over the data)
        pieces = pieces + [jnp.zeros((N, Ho, Wo, Kp - K), jnp.bfloat16)]
        cols = jnp.concatenate(pieces, axis=-1)
    elif len(pieces) > 1:
        cols = jnp.concatenate(pieces, axis=-1)
    else:
        cols = pieces[0]
    cols = cols.reshape(N * Ho * Wo, Kp)
    res2d = None if residual is None else residual.reshape(N * Ho * Wo, Cout)
    out = matmul_bias_act(cols, wmat, bias, act=act, out_dtype=out_dtype,
                          residual=res2d)
    return out.reshape(N, Ho, Wo, Cout)


def conv2d(x, p, stride=1, padding=None, act='none', residual=None,
           out_dtype=jnp.bfloat16):
    if padding is None:
        padding = (p.k - 1) // 2
    return _conv2d_impl(x, p.wmat, p.bias, residual, k=p.k, stride=stride,
                        padding=padding, act=act, out_dtype=out_dtype)


def conv7_xla(x, p, act='none'):
    """SpyNet 7x7 convs via XLA's native conv (avoids a 49x im2col blow-up)."""
    k = p.k
    cin = p.wmat.shape[0] // (k * k)
    w = p.wmat.reshape(k, k, cin, -1)                 # HWIO
    y = lax.conv_general_dilated(
        x.astype(jnp.bfloat16), w, window_strides=(1, 1),
        padding=((k // 2, k // 2), (k // 2, k // 2)),
        dimension_numbers=('NHWC', 'HWIO', 'NHWC'),
        preferred_element_type=jnp.float32)
    y = y + p.bias.reshape(1, 1, 1, -1)
    if act == 'relu':
        y = jnp.maximum(y, 0.0)
    return y


def lrelu(x):
    return jnp.where(x >= 0, x, 0.1 * x)


def pixel_shuffle(x, r):
    # NHWC; channel index = co*r*r + i*r + j (PyTorch ordering)
    N, H, W, C = x.shape
    Co = C // (r * r)
    x = x.reshape(N, H, W, Co, r, r).transpose(0, 1, 4, 2, 5, 3)
    return x.reshape(N, H * r, W * r, Co)


def avg_pool_2x2(x):
    N, H, W, C = x.shape
    Ho, Wo = H // 2, W // 2
    return x[:, :Ho * 2, :Wo * 2, :].reshape(N, Ho, 2, Wo, 2, C).mean(axis=(2, 4))


# ----------------------------- resizing (PyTorch F.interpolate semantics, NHWC) ----
def _linear_coords(in_size, out_size, align_corners):
    d = np.arange(out_size, dtype=np.float64)
    if align_corners:
        src = d * (in_size - 1) / max(out_size - 1, 1)
    else:
        src = np.maximum((d + 0.5) * (in_size / out_size) - 0.5, 0.0)
    x0 = np.clip(np.floor(src).astype(np.int32), 0, in_size - 1)
    x1 = np.minimum(x0 + 1, in_size - 1)
    w1 = (src - x0).astype(np.float32)
    w0 = (1.0 - w1).astype(np.float32)
    return jnp.asarray(x0), jnp.asarray(x1), jnp.asarray(w0), jnp.asarray(w1)


def resize_bilinear(x, out_h, out_w, align_corners=False):
    _, H, W, _ = x.shape
    y0, y1, wy0, wy1 = _linear_coords(H, out_h, align_corners)
    xr = (jnp.take(x, y0, axis=1) * wy0[None, :, None, None]
          + jnp.take(x, y1, axis=1) * wy1[None, :, None, None])
    x0, x1, wx0, wx1 = _linear_coords(W, out_w, align_corners)
    return (jnp.take(xr, x0, axis=2) * wx0[None, None, :, None]
            + jnp.take(xr, x1, axis=2) * wx1[None, None, :, None])


def _cubic_kernel_np(t):
    a = -0.75
    at = np.abs(t)
    return np.where(at <= 1, ((a + 2) * at - (a + 3)) * at * at + 1,
                    np.where(at < 2, a * (((at - 5) * at + 8) * at - 4), 0.0))


def _cubic_coords(in_size, out_size):
    d = np.arange(out_size, dtype=np.float64)
    src = (d + 0.5) * (in_size / out_size) - 0.5
    x0 = np.floor(src).astype(np.int32)
    t = src - np.floor(src)
    idxs = [jnp.asarray(np.clip(x0 + k, 0, in_size - 1)) for k in (-1, 0, 1, 2)]
    ws = [jnp.asarray(_cubic_kernel_np(t + 1.0).astype(np.float32)),
          jnp.asarray(_cubic_kernel_np(t).astype(np.float32)),
          jnp.asarray(_cubic_kernel_np(1.0 - t).astype(np.float32)),
          jnp.asarray(_cubic_kernel_np(2.0 - t).astype(np.float32))]
    return idxs, ws


def resize_bicubic(x, out_h, out_w):
    _, H, W, _ = x.shape
    idxs, ws = _cubic_coords(H, out_h)
    xr = sum(jnp.take(x, ii, axis=1) * wi[None, :, None, None] for ii, wi in zip(idxs, ws))
    idxs, ws = _cubic_coords(W, out_w)
    return sum(jnp.take(xr, ii, axis=2) * wi[None, None, :, None] for ii, wi in zip(idxs, ws))


# ----------------------------- warping / deformable sampling (NHWC) -----------------
# TODO(synk): the bilinear gather for flow_warp / deformable conv stays in XLA; a fused
# Pallas gather kernel (scalar-prefetched indices + VMEM-resident tile) is future work.
def _grid_sample_bilinear(x, px, py, padding_mode):
    N, H, W, C = x.shape
    Ho, Wo = px.shape[1], px.shape[2]
    if padding_mode == 'border':
        px = jnp.clip(px, 0.0, W - 1.0)
        py = jnp.clip(py, 0.0, H - 1.0)
    x0 = jnp.floor(px)
    y0 = jnp.floor(py)
    x1f = x0 + 1.0
    y1f = y0 + 1.0
    wx1 = px - x0
    wx0 = 1.0 - wx1
    wy1 = py - y0
    wy0 = 1.0 - wy1

    xf = x.reshape(N, H * W, C)

    def gather(yi, xi):
        yc = jnp.clip(yi, 0, H - 1).astype(jnp.int32)
        xc = jnp.clip(xi, 0, W - 1).astype(jnp.int32)
        idx = (yc * W + xc).reshape(N, Ho * Wo, 1)
        v = jnp.take_along_axis(xf, jnp.broadcast_to(idx, (N, Ho * Wo, C)), axis=1)
        v = v.reshape(N, Ho, Wo, C)
        if padding_mode == 'zeros':
            valid = ((yi > -1) & (yi < H) & (xi > -1) & (xi < W)).astype(v.dtype)
            v = v * valid[..., None]
        return v

    return (gather(y0, x0) * (wy0 * wx0)[..., None]
            + gather(y0, x1f) * (wy0 * wx1)[..., None]
            + gather(y1f, x0) * (wy1 * wx0)[..., None]
            + gather(y1f, x1f) * (wy1 * wx1)[..., None])


@partial(jax.jit, static_argnames=('padding_mode',))
def flow_warp(x, flow, padding_mode='zeros'):
    """x:(N,H,W,C), flow:(N,H,W,2) pixel offsets (x,y); align_corners=True grid_sample."""
    N, H, W, C = x.shape
    gy, gx = jnp.meshgrid(jnp.arange(H, dtype=jnp.float32),
                          jnp.arange(W, dtype=jnp.float32), indexing='ij')
    px = gx[None] + flow[..., 0]
    py = gy[None] + flow[..., 1]
    return _grid_sample_bilinear(x, px, py, padding_mode)


@partial(jax.jit, static_argnames=('k', 'stride', 'padding', 'dilation',
                                   'deform_groups', 'out_dtype'))
def modulated_deform_conv2d(x, offset, mask, wmat, bias, k, stride=1, padding=1,
                            dilation=1, deform_groups=1, out_dtype=jnp.bfloat16):
    """NHWC modulated deformable conv.  Offset channel layout matches mmcv:
    (deform_group, kernel_pos, (dy, dx)).  TODO(synk): groups > 1 not implemented
    (AverNet always uses groups=1)."""
    N, H, W, C = x.shape
    kh = kw = k
    K = kh * kw
    dg = deform_groups
    cg = C // dg
    Cout = wmat.shape[1]
    Ho = (H + 2 * padding - dilation * (kh - 1) - 1) // stride + 1
    Wo = (W + 2 * padding - dilation * (kw - 1) - 1) // stride + 1

    off = offset.reshape(N, Ho, Wo, dg, K, 2).astype(jnp.float32)
    dy, dx = off[..., 0], off[..., 1]                       # (N,Ho,Wo,dg,K)
    m = mask.reshape(N, Ho, Wo, dg, K).astype(jnp.float32)

    ky = jnp.repeat(jnp.arange(kh) * dilation, kw).astype(jnp.float32)   # (K,)
    kx = jnp.tile(jnp.arange(kw) * dilation, kh).astype(jnp.float32)
    base_y = (jnp.arange(Ho) * stride - padding).astype(jnp.float32)
    base_x = (jnp.arange(Wo) * stride - padding).astype(jnp.float32)
    py = base_y[None, :, None, None, None] + ky[None, None, None, None, :] + dy
    px = base_x[None, None, :, None, None] + kx[None, None, None, None, :] + dx

    xg = x.astype(jnp.bfloat16).reshape(N, H * W, dg, cg)

    y0 = jnp.floor(py)
    x0 = jnp.floor(px)
    wy1 = py - y0
    wy0 = 1.0 - wy1
    wx1 = px - x0
    wx0 = 1.0 - wx1

    def kdg(w_):
        # (N,Ho,Wo,dg,K) -> (N,Ho,Wo,K,dg,1)
        return jnp.transpose(w_, (0, 1, 2, 4, 3))[..., None]

    def gather(yi, xi):
        yc = jnp.clip(yi, 0, H - 1).astype(jnp.int32)
        xc = jnp.clip(xi, 0, W - 1).astype(jnp.int32)
        idx = jnp.transpose(yc * W + xc, (0, 1, 2, 4, 3)).reshape(N, Ho * Wo * K, dg, 1)
        v = jnp.take_along_axis(xg, jnp.broadcast_to(idx, (N, Ho * Wo * K, dg, cg)), axis=1)
        v = v.reshape(N, Ho, Wo, K, dg, cg).astype(jnp.float32)
        valid = ((yi > -1) & (yi < H) & (xi > -1) & (xi < W)).astype(jnp.float32)
        return v * kdg(valid)

    samp = (gather(y0, x0) * kdg(wy0 * wx0)
            + gather(y0, x0 + 1) * kdg(wy0 * wx1)
            + gather(y0 + 1, x0) * kdg(wy1 * wx0)
            + gather(y0 + 1, x0 + 1) * kdg(wy1 * wx1))
    samp = samp * kdg(m)                                     # (N,Ho,Wo,K,dg,cg)

    cols = samp.reshape(N * Ho * Wo, K * C).astype(jnp.bfloat16)   # column order = (k, cin)
    out = matmul_bias_act(cols, wmat, bias, act='none', out_dtype=out_dtype)
    return out.reshape(N, Ho, Wo, Cout)


# -----------------------------------------------------------------------------
# Deterministic parameter generation (weights pre-packed for the NHWC GEMM)
# -----------------------------------------------------------------------------
class ParamGen:
    def __init__(self, seed=0):
        self.key = jax.random.PRNGKey(seed)

    def _next(self):
        self.key, k = jax.random.split(self.key)
        return k

    def conv(self, cout, cin, k, bias=True, zero=False, scale=0.05):
        if zero:
            w = jnp.zeros((cout, cin, k, k), jnp.float32)
        else:
            w = scale * jax.random.normal(self._next(), (cout, cin, k, k), dtype=jnp.float32)
        # pre-pack once: rows ordered (dy, dx, cin) to match NHWC im2col columns; bf16 for MXU
        wmat = jnp.transpose(w, (2, 3, 1, 0)).reshape(k * k * cin, cout).astype(jnp.bfloat16)
        # NOTE: biases are synthesized as zeros, so bias=False convs are numerically identical.
        b = jnp.zeros((cout,), jnp.float32)
        return ConvParams(wmat, b, k)

    def linear(self, out_f, in_f, scale=0.05):
        w = scale * jax.random.normal(self._next(), (in_f, out_f), dtype=jnp.float32)
        return w, jnp.zeros((out_f,), jnp.float32)

    def uniform(self, shape):
        return jax.random.uniform(self._next(), shape, dtype=jnp.float32)


# -----------------------------------------------------------------------------
# Sub-modules (all activations NHWC, bf16 internally)
# -----------------------------------------------------------------------------
class ResidualBlocksWithInputConv:
    def __init__(self, pg, in_ch, out_ch, num_blocks):
        self.conv_in = pg.conv(out_ch, in_ch, 3)
        self.blocks = [(pg.conv(out_ch, out_ch, 3), pg.conv(out_ch, out_ch, 3))
                       for _ in range(num_blocks)]

    def __call__(self, x):
        x = conv2d(x, self.conv_in, act='lrelu')
        for c1, c2 in self.blocks:
            y = conv2d(x, c1, act='relu')
            # identity + conv2(relu(conv1(x))) with the residual add fused in the GEMM epilogue
            x = conv2d(y, c2, act='none', residual=x)
        return x


class PixelShufflePack:
    def __init__(self, pg, in_ch, out_ch, scale_factor, upsample_kernel):
        self.scale = scale_factor
        self.pad = (upsample_kernel - 1) // 2
        self.conv = pg.conv(out_ch * scale_factor ** 2, in_ch, upsample_kernel)

    def __call__(self, x, act='none'):
        # act (lrelu) commutes with the pixel-shuffle permutation -> fold into the conv epilogue
        x = conv2d(x, self.conv, padding=self.pad, act=act)
        return pixel_shuffle(x, self.scale)


class PromptGenerationInteraction:
    def __init__(self, pg, embed_dim=64, prompt_dim=96, prompt_len=5,
                 prompt_size=96, num_blocks=3, align=False):
        self.align = align
        self.prompt_dim = prompt_dim
        self.prompt_size = prompt_size
        pp = pg.uniform((prompt_len, prompt_dim, prompt_size, prompt_size))
        self.prompt_hwc = jnp.transpose(pp, (0, 2, 3, 1))       # (L, S, S, D), f32
        self.lin_w, self.lin_b = pg.linear(prompt_len, embed_dim)
        self.conv = pg.conv(prompt_dim, prompt_dim, 3, bias=False)
        self.residual = ResidualBlocksWithInputConv(pg, embed_dim + prompt_dim, embed_dim, num_blocks)

    def __call__(self, x):
        b, h, w, c = x.shape
        emb = jnp.mean(x.astype(jnp.float32), axis=(1, 2))              # (b, C)
        logits = emb @ self.lin_w + self.lin_b                          # tiny -> plain jnp
        prompt_weights = jax.nn.softmax(logits, axis=1)                 # (b, L)
        prompt = jnp.einsum('bl,lhwc->bhwc', prompt_weights, self.prompt_hwc)
        prompt = resize_bilinear(prompt, h, w, align_corners=False)
        prompt = conv2d(prompt, self.conv, act='none')
        return self.residual(jnp.concatenate([x, prompt.astype(x.dtype)], axis=-1))


class PromptGuidedAlignment:
    def __init__(self, pg, in_channels, out_channels, kernel_size, padding=1,
                 deform_groups=1, max_residue_magnitude=10, prompt_dim=96):
        self.max_residue_magnitude = max_residue_magnitude
        self.out_channels = out_channels
        self.stride, self.padding, self.dilation = 1, padding, 1
        self.deform_groups = deform_groups
        self.weight = pg.conv(out_channels, in_channels, kernel_size)     # deform-conv weight/bias
        self.proj = pg.conv(out_channels, 2 * out_channels, 3)
        self.PGI_align = PromptGenerationInteraction(pg, embed_dim=out_channels,
                                                     prompt_dim=prompt_dim, num_blocks=1, align=True)
        self.fusion = pg.conv(2 * out_channels, 3 * out_channels, 3)
        self.conv_offset = [
            pg.conv(out_channels, 2 * out_channels + 2, 3),
            pg.conv(out_channels, out_channels, 3),
            pg.conv(out_channels, out_channels, 3),
            pg.conv(27 * deform_groups, out_channels, 3, zero=True),      # constant_init(0, 0)
        ]

    def __call__(self, x, cond, flow):
        proj_cond = conv2d(cond, self.proj, act='none')
        integrated = self.PGI_align(proj_cond)
        cond = conv2d(jnp.concatenate([integrated, cond], axis=-1), self.fusion, act='none')
        cond = jnp.concatenate([cond, flow.astype(cond.dtype)], axis=-1)
        o = conv2d(cond, self.conv_offset[0], act='lrelu')
        o = conv2d(o, self.conv_offset[1], act='lrelu')
        o = conv2d(o, self.conv_offset[2], act='lrelu')
        out = conv2d(o, self.conv_offset[3], act='none', out_dtype=jnp.float32)
        o1, o2, mask = jnp.split(out, 3, axis=-1)
        offset = self.max_residue_magnitude * jnp.tanh(jnp.concatenate([o1, o2], axis=-1))
        offset = offset + jnp.tile(flow[..., ::-1], (1, 1, 1, offset.shape[-1] // 2))
        mask = jax.nn.sigmoid(mask)
        return modulated_deform_conv2d(x, offset, mask, self.weight.wmat, self.weight.bias,
                                       k=self.weight.k, stride=self.stride,
                                       padding=self.padding, dilation=self.dilation,
                                       deform_groups=self.deform_groups)


class SpyNet:
    # TODO(synk): original loads pretrained SpyNet weights; replaced by deterministic random init.
    def __init__(self, pg):
        self.basic_modules = [[pg.conv(32, 8, 7), pg.conv(64, 32, 7), pg.conv(32, 64, 7),
                               pg.conv(16, 32, 7), pg.conv(2, 16, 7)] for _ in range(6)]
        self.mean = jnp.array([0.485, 0.456, 0.406], jnp.float32).reshape(1, 1, 1, 3)
        self.std = jnp.array([0.229, 0.224, 0.225], jnp.float32).reshape(1, 1, 1, 3)

    def _basic(self, level, x):
        convs = self.basic_modules[level]
        for c in convs[:-1]:
            x = conv7_xla(x, c, act='relu')
        return conv7_xla(x, convs[-1], act='none')

    def _process(self, ref, supp):
        ref = [(ref - self.mean) / self.std]
        supp = [(supp - self.mean) / self.std]
        for _ in range(5):
            ref.insert(0, avg_pool_2x2(ref[0]))
            supp.insert(0, avg_pool_2x2(supp[0]))
        n = ref[0].shape[0]
        flow = jnp.zeros((n, ref[0].shape[1] // 2, ref[0].shape[2] // 2, 2), jnp.float32)
        for level in range(len(ref)):
            up = resize_bilinear(flow, flow.shape[1] * 2, flow.shape[2] * 2,
                                 align_corners=True) * 2.0
            if up.shape[1] != ref[level].shape[1]:
                up = jnp.pad(up, ((0, 0), (0, ref[level].shape[1] - up.shape[1]), (0, 0), (0, 0)),
                             mode='edge')
            if up.shape[2] != ref[level].shape[2]:
                up = jnp.pad(up, ((0, 0), (0, 0), (0, ref[level].shape[2] - up.shape[2]), (0, 0)),
                             mode='edge')
            warped = flow_warp(supp[level], up, padding_mode='border')
            flow = self._basic(level, jnp.concatenate([ref[level], warped, up], axis=-1)) + up
        return flow

    def __call__(self, ref, supp):
        h, w = ref.shape[1], ref.shape[2]
        w_up = int(math.floor(math.ceil(w / 32.0) * 32.0))
        h_up = int(math.floor(math.ceil(h / 32.0) * 32.0))
        ref_r = resize_bilinear(ref, h_up, w_up, align_corners=False)
        supp_r = resize_bilinear(supp, h_up, w_up, align_corners=False)
        flow = resize_bilinear(self._process(ref_r, supp_r), h, w, align_corners=False)
        scale = jnp.array([w / w_up, h / h_up], jnp.float32).reshape(1, 1, 1, 2)
        return flow * scale


# -----------------------------------------------------------------------------
# AverNet
# -----------------------------------------------------------------------------
class AverNet:
    def __init__(self, pg, mid_channels=96, num_blocks=7, max_residue_magnitude=10,
                 keyframe_interval=6, prompt_size=96, prompt_dim=96):
        self.mid_channels = mid_channels
        self.prompt_dim = prompt_dim
        self.prompt_size = prompt_size
        self.keyframe_interval = keyframe_interval
        self.spynet = SpyNet(pg)
        # feat_extract
        self.fe_conv1 = pg.conv(mid_channels, 3, 3)
        self.fe_conv2 = pg.conv(mid_channels, mid_channels, 3)
        self.fe_res = ResidualBlocksWithInputConv(pg, mid_channels, mid_channels, 5)
        self.PGI_prop = PromptGenerationInteraction(pg, embed_dim=mid_channels,
                                                    prompt_dim=prompt_dim,
                                                    prompt_size=prompt_size, num_blocks=3)
        self.key_fusion = pg.conv(mid_channels, 2 * mid_channels, 3)
        self.modules_order = ['backward_1', 'forward_1', 'backward_2', 'forward_2']
        self.deform_align, self.backbone = {}, {}
        for i, module in enumerate(self.modules_order):
            self.deform_align[module] = PromptGuidedAlignment(
                pg, mid_channels, mid_channels, 3, padding=1, deform_groups=24,
                max_residue_magnitude=max_residue_magnitude, prompt_dim=prompt_dim)
            self.backbone[module] = ResidualBlocksWithInputConv(
                pg, (2 + i) * mid_channels, mid_channels, num_blocks)
        self.reconstruction = ResidualBlocksWithInputConv(pg, 5 * mid_channels, mid_channels, 5)
        self.upsample1 = PixelShufflePack(pg, mid_channels, mid_channels, 2, 3)
        self.upsample2 = PixelShufflePack(pg, mid_channels, 64, 2, 3)
        self.conv_hr = pg.conv(64, 64, 3)
        self.conv_last = pg.conv(3, 64, 3)

    def feat_extract(self, x):
        x = conv2d(x, self.fe_conv1, stride=2, padding=1, act='lrelu')
        x = conv2d(x, self.fe_conv2, stride=2, padding=1, act='lrelu')
        return self.fe_res(x)

    def compute_flow(self, lqs):
        n, t, h, w, c = lqs.shape
        lqs_1 = lqs[:, :-1].reshape(-1, h, w, c)
        lqs_2 = lqs[:, 1:].reshape(-1, h, w, c)
        flows_backward = self.spynet(lqs_1, lqs_2).reshape(n, t - 1, h, w, 2)
        flows_forward = self.spynet(lqs_2, lqs_1).reshape(n, t - 1, h, w, 2)
        return flows_forward, flows_backward

    def upsample(self, lqs, feats):
        outputs = []
        num_outputs = len(feats['spatial'])
        mapping_idx = list(range(0, num_outputs))
        mapping_idx += mapping_idx[::-1]
        for i in range(lqs.shape[1]):
            hr = [feats[k].pop(0) for k in feats if k != 'spatial']
            hr.insert(0, feats['spatial'][mapping_idx[i]])
            hr = jnp.concatenate(hr, axis=-1)
            hr = self.reconstruction(hr)
            hr = self.upsample1(hr, act='lrelu')          # lrelu fused into the conv epilogue
            hr = self.upsample2(hr, act='lrelu')
            hr = conv2d(hr, self.conv_hr, act='lrelu')
            # final conv with the `hr += lq` residual fused into the GEMM epilogue (f32)
            hr = conv2d(hr, self.conv_last, act='none', residual=lqs[:, i],
                        out_dtype=jnp.float32)
            outputs.append(hr)
        return jnp.stack(outputs, axis=1)

    def forward(self, lqs):
        n, t, c, h, w = lqs.shape
        lqs_nhwc = jnp.transpose(lqs, (0, 1, 3, 4, 2))            # NCHW -> NHWC (boundary only)
        lqs_flat = lqs_nhwc.reshape(n * t, h, w, c)
        lqs_downsample = resize_bicubic(lqs_flat, h // 4, w // 4).reshape(n, t, h // 4, w // 4, c)

        feats = {}
        feats_ = self.feat_extract(lqs_flat)
        hf, wf = feats_.shape[1], feats_.shape[2]
        feats_ = feats_.reshape(n, t, hf, wf, -1)
        feats['spatial'] = [feats_[:, i] for i in range(t)]

        # TODO(synk): original asserts downsampled H,W >= 64; relaxed to >= 33 so the demo fits small shapes.
        assert lqs_downsample.shape[2] >= 33 and lqs_downsample.shape[3] >= 33

        flows_forward, flows_backward = self.compute_flow(lqs_downsample)

        keyframe_idx = list(range(0, t, self.keyframe_interval))
        if keyframe_idx[-1] != t - 1:
            keyframe_idx.append(t - 1)
        feats_keyframe = {i: self.PGI_prop(feats['spatial'][i]) for i in keyframe_idx}

        for iter_ in [1, 2]:
            for direction in ['backward', 'forward']:
                module = f'{direction}_{iter_}'
                feats[module] = []
                flows = flows_backward if direction == 'backward' else flows_forward
                n_, t_, h_, w_, _ = flows.shape
                frame_idx = list(range(0, t_ + 1))
                flow_idx = list(range(-1, t_))
                mapping_idx = list(range(0, len(feats['spatial'])))
                mapping_idx += mapping_idx[::-1]
                if direction == 'backward':
                    frame_idx = frame_idx[::-1]
                    flow_idx = frame_idx
                feat_prop = jnp.zeros((n_, h_, w_, self.mid_channels), jnp.bfloat16)
                for i, idx in enumerate(frame_idx):
                    x_i = feats['spatial'][mapping_idx[idx]]
                    pre_feat = feat_prop
                    if i > 0:
                        flow = flows[:, flow_idx[i]]
                        feat_prop = flow_warp(feat_prop, flow, padding_mode='zeros')
                        cond = jnp.concatenate([feat_prop.astype(x_i.dtype), x_i], axis=-1)
                        feat_prop = self.deform_align[module](pre_feat, cond, flow)
                    if idx in keyframe_idx:
                        feat_prop = conv2d(jnp.concatenate([feat_prop, feats_keyframe[idx]], axis=-1),
                                           self.key_fusion, act='none')
                    feat = [x_i] + [feats[k][idx] for k in feats
                                    if k not in ['spatial', module]] + [feat_prop]
                    feat = jnp.concatenate(feat, axis=-1)
                    feat_prop = feat_prop + self.backbone[module](feat)
                    feats[module].append(feat_prop)
                if direction == 'backward':
                    feats[module] = feats[module][::-1]
        out = self.upsample(lqs_nhwc, feats)
        return jnp.transpose(out, (0, 1, 4, 2, 3))                # NHWC -> NCHW (boundary only)


# -----------------------------------------------------------------------------
if __name__ == "__main__":
    key = jax.random.PRNGKey(0)
    # small but SpyNet-compatible shapes: (n, t, c, h, w); h, w divisible by 4, h/4 >= 33
    n, t, c, h, w = 1, 2, 3, 144, 144
    lqs = jax.random.uniform(key, (n, t, c, h, w), dtype=jnp.float32)

    pg = ParamGen(0)
    model = AverNet(pg, mid_channels=24, num_blocks=1, max_residue_magnitude=10,
                    keyframe_interval=6, prompt_size=24, prompt_dim=24)

    out = model.forward(lqs)
    out = jax.block_until_ready(out)
    assert out.shape == (n, t, c, h, w), out.shape
    assert bool(jnp.all(jnp.isfinite(out)))
    print("KERNEL_OK")
</pallas_src>

<mosaic_0001>
module attributes {stable_mosaic.version = 11 : i64} {
  func.func @kern(%arg0: i32, %arg1: i32, %arg2: memref<512x32xbf16, #tpu.memory_space<vmem>>, %arg3: memref<32x128xbf16, #tpu.memory_space<vmem>>, %arg4: memref<1x128xf32, #tpu.memory_space<vmem>>, %arg5: memref<512x128xbf16, #tpu.memory_space<vmem>>) attributes {dimension_semantics = [#tpu.dimension_semantics<parallel>, #tpu.dimension_semantics<parallel>], iteration_bounds = array<i64: 21, 1>, scalar_prefetch = 0 : i64, scratch_operands = 0 : i64, tpu.core_type = #tpu.core_type<tc>, window_params = [{transform_indices = @transform_0, window_bounds = array<i64: 512, 32>}, {transform_indices = @transform_1, window_bounds = array<i64: 32, 128>}, {transform_indices = @transform_2, window_bounds = array<i64: 1, 128>}, {transform_indices = @transform_3, window_bounds = array<i64: 512, 128>}]} {
    %c0 = arith.constant 0 : index
    %c0_0 = arith.constant 0 : index
    %0 = vector.load %arg2[%c0, %c0_0] : memref<512x32xbf16, #tpu.memory_space<vmem>>, vector<512x32xbf16>
    %c0_1 = arith.constant 0 : index
    %c0_2 = arith.constant 0 : index
    %1 = vector.load %arg3[%c0_1, %c0_2] : memref<32x128xbf16, #tpu.memory_space<vmem>>, vector<32x128xbf16>
    %cst = arith.constant dense<0.000000e+00> : vector<512x128xf32>
    %2 = tpu.matmul %0, %1, %cst {dimension_numbers = #tpu.dot_dimension_numbers<[1], [0], [0], [1], [0, 0, 1, 1], [], []>} : vector<512x32xbf16>, vector<32x128xbf16>, vector<512x128xf32> -> vector<512x128xf32>
    %c0_3 = arith.constant 0 : index
    %c0_4 = arith.constant 0 : index
    %3 = vector.load %arg4[%c0_3, %c0_4] : memref<1x128xf32, #tpu.memory_space<vmem>>, vector<1x128xf32>
    %4 = vector.broadcast %3 : vector<1x128xf32> to vector<512x128xf32>
    %5 = arith.addf %2, %4 : vector<512x128xf32>
    %cst_5 = arith.constant 0.000000e+00 : f32
    %6 = vector.broadcast %cst_5 : f32 to vector<512x128xf32>
    %7 = arith.cmpf oge, %5, %6 : vector<512x128xf32>
    %cst_6 = arith.constant 1.000000e-01 : f32
    %8 = vector.broadcast %cst_6 : f32 to vector<512x128xf32>
    %9 = arith.mulf %8, %5 : vector<512x128xf32>
    %10 = arith.select %7, %5, %9 : vector<512x128xi1>, vector<512x128xf32>
    %11 = arith.truncf %10 : vector<512x128xf32> to vector<512x128xbf16>
    %c0_7 = arith.constant 0 : index
    %c0_8 = arith.constant 0 : index
    %12 = vector.load %arg5[%c0_7, %c0_8] : memref<512x128xbf16, #tpu.memory_space<vmem>>, vector<512x128xbf16>
    tpu.vector_store %arg5[%c0_7, %c0_8], %11 {strides = array<i32>} : memref<512x128xbf16, #tpu.memory_space<vmem>>, vector<512x128xbf16>,
    return
  }
  func.func @transform_0(%arg0: i32, %arg1: i32) -> (i32, i32) {
    %c0_i32 = arith.constant 0 : i32
    %c0_i32_0 = arith.constant 0 : i32
    return %arg0, %c0_i32 : i32, i32
  }
  func.func @transform_1(%arg0: i32, %arg1: i32) -> (i32, i32) {
    %c0_i32 = arith.constant 0 : i32
    %c0_i32_0 = arith.constant 0 : i32
    return %c0_i32, %arg1 : i32, i32
  }
  func.func @transform_2(%arg0: i32, %arg1: i32) -> (i32, i32) {
    %c0_i32 = arith.constant 0 : i32
    %c0_i32_0 = arith.constant 0 : i32
    return %c0_i32, %arg1 : i32, i32
  }
  func.func @transform_3(%arg0: i32, %arg1: i32) -> (i32, i32) {
    %c0_i32 = arith.constant 0 : i32
    return %arg0, %arg1 : i32, i32
  }
}

</mosaic_0001>

<llo_original>
// kernel: matmul_bias_act.1
$region0: #{matmul_bias_act.1}
  #allocation0 [shape = 'u32[]', space=smem, size = 0x4, offset = 0x4, fixed_abs, tag = 'smem constant byte address 0x4 - core index']
  #allocation1 [shape = 'u32[72,128]{1,0:T(1,128)}', space=vmem, size = 0x9000, scoped, tag = 'internal scratch']
  %s0 = inlined_call_operand.vmem [shape: bf16[10368,32], index: 0, kind: input, shape index: {}]
  %s1 = inlined_call_operand.vmem [shape: bf16[32,24], index: 1, kind: input, shape index: {}]
  %s2 = inlined_call_operand.vmem [shape: f32[1,24], index: 2, kind: input, shape index: {}]
  %s3 = inlined_call_operand.vmem [shape: bf16[10368,24], index: 3, kind: output, shape index: {}]
  %s4 = sld [smem:[#allocation0]]
  $region89: #{matmul_bias_act.1} parent=0
    _
  %s6 = ssub.s32 1, %s4
  %s7 = scalar_select 0, %s6, %s4
  $region1: #{matmul_bias_act.1} parent=0
    #allocation2 [shape = 'u8[262144]{0}', space=vmem, size = 0x40000, scoped, tag = 'output window, operand 0']
    loop: start=0, step=1, limit=23
    $region2: #{matmul_bias_act.1} parent=1 // loop_pre_header
      _
    $region3: #{matmul_bias_act.1} parent=1 // loop_header
      %s9 = sphi 0, %s13
      %p10 = scmp.ge.s32.totalorder %s9, 23
      %s16 = sphi 0, %s28
      %s17 = sphi 0, %s24
      %s18 = sphi 0, %s16
      %s19 = sphi 0, %s17
      %s20 = sphi 0, %s18
      %s21 = sphi 0, %s19
      %s31 = sphi 0, %s33
      %s34 = sphi 0, %s31
      %s35 = sphi 0, %s34
      %s51 = sphi 0, %s35
      %s57 = sphi 0, %s59
      %s60 = sphi 0, %s57
      %s61 = sphi 0, %s60
      %s77 = sphi 0, %s61
      %s83 = sphi 0, %s85
      %s86 = sphi 0, %s83
      %s87 = sphi 0, %s86
      %s103 = sphi 0, %s87
      %s111 = sphi 0, %s113
      %s114 = sphi 0, %s111
      %s115 = sphi 0, %s114
      %s131 = sphi 0, %s115
    $region4: #{matmul_bias_act.1} parent=1 // loop_header_branch
      %12 = sbr.rel (%p10) target = $region8
    $region5: #{matmul_bias_act.1} parent=1 // loop_body
      %s14 = ssub.s32 %s9, 1
      %s15 = ssub.s32 %s9, 2
      %s22 = sadd.s32 1, %s17
      %p23 = scmp.ge.s32.totalorder %s22, 1
      %s24 = scalar_select %p23, 0, %s22
      %s25 = sadd.s32 1, %s16
      %s26 = scalar_select %p23, %s25, %s16
      %p27 = scmp.ge.s32.totalorder %s26, 21
      %s28 = scalar_select %p27, 0, %s26
      %s29 = ssub.s32 %s16, %s28
      %p30 = scmp.eq.s32.totalorder %s29, 0
      %s32 = sadd.s32 %s31, 1
      %s33 = scalar_select %p30, %s31, %s32
      %p36 = pneg %p30
      %p37 = scmp.eq.s32.totalorder %s9, 20
      %p38 = por %p36, %p37
      %p39 = scmp.ne.s32.totalorder %s31, %s34
      %p40 = scmp.eq.s32.totalorder %s9, 0
      %p41 = por %p39, %p40
      %p42 = scmp.ne.s32.totalorder %s31, %s34
      %p43 = scmp.eq.s32.totalorder %s14, 20
      %p44 = por %p42, %p43
      %p45 = scmp.ne.s32.totalorder %s34, %s35
      %p46 = scmp.eq.s32.totalorder %s14, 0
      %p47 = por %p45, %p46
      %p48 = scmp.ne.s32.totalorder %s34, %s35
      %p49 = scmp.eq.s32.totalorder %s15, 20
      %p50 = por %p48, %p49
      %p52 = scmp.ne.s32.totalorder %s35, %s51
      %p53 = scmp.eq.s32.totalorder %s15, 0
      %p54 = por %p52, %p53
      %s55 = ssub.s32 %s17, %s24
      %p56 = scmp.eq.s32.totalorder %s55, 0
      %s58 = sadd.s32 %s57, 1
      %s59 = scalar_select %p56, %s57, %s58
      %p62 = pneg %p56
      %p63 = scmp.eq.s32.totalorder %s9, 20
      %p64 = por %p62, %p63
      %p65 = scmp.ne.s32.totalorder %s57, %s60
      %p66 = scmp.eq.s32.totalorder %s9, 0
      %p67 = por %p65, %p66
      %p68 = scmp.ne.s32.totalorder %s57, %s60
      %p69 = scmp.eq.s32.totalorder %s14, 20
      %p70 = por %p68, %p69
      %p71 = scmp.ne.s32.totalorder %s60, %s61
      %p72 = scmp.eq.s32.totalorder %s14, 0
      %p73 = por %p71, %p72
      %p74 = scmp.ne.s32.totalorder %s60, %s61
      %p75 = scmp.eq.s32.totalorder %s15, 20
      %p76 = por %p74, %p75
      %p78 = scmp.ne.s32.totalorder %s61, %s77
      %p79 = scmp.eq.s32.totalorder %s15, 0
      %p80 = por %p78, %p79
      %s81 = ssub.s32 %s17, %s24
      %p82 = scmp.eq.s32.totalorder %s81, 0
      %s84 = sadd.s32 %s83, 1
      %s85 = scalar_select %p82, %s83, %s84
      %p88 = pneg %p82
      %p89 = scmp.eq.s32.totalorder %s9, 20
      %p90 = por %p88, %p89
      %p91 = scmp.ne.s32.totalorder %s83, %s86
      %p92 = scmp.eq.s32.totalorder %s9, 0
      %p93 = por %p91, %p92
      %p94 = scmp.ne.s32.totalorder %s83, %s86
      %p95 = scmp.eq.s32.totalorder %s14, 20
      %p96 = por %p94, %p95
      %p97 = scmp.ne.s32.totalorder %s86, %s87
      %p98 = scmp.eq.s32.totalorder %s14, 0
      %p99 = por %p97, %p98
      %p100 = scmp.ne.s32.totalorder %s86, %s87
      %p101 = scmp.eq.s32.totalorder %s15, 20
      %p102 = por %p100, %p101
      %p104 = scmp.ne.s32.totalorder %s87, %s103
      %p105 = scmp.eq.s32.totalorder %s15, 0
      %p106 = por %p104, %p105
      %s107 = ssub.s32 %s16, %s28
      %s108 = ssub.s32 %s17, %s24
      %s109 = sor.u32 %s107, %s108
      %p110 = scmp.eq.s32.totalorder %s109, 0
      %s112 = sadd.s32 %s111, 1
      %s113 = scalar_select %p110, %s111, %s112
      %p116 = pneg %p110
      %p117 = scmp.eq.s32.totalorder %s9, 20
      %p118 = por %p116, %p117
      %p119 = scmp.ne.s32.totalorder %s111, %s114
      %p120 = scmp.eq.s32.totalorder %s9, 0
      %p121 = por %p119, %p120
      %p122 = scmp.ne.s32.totalorder %s111, %s114
      %p123 = scmp.eq.s32.totalorder %s14, 20
      %p124 = por %p122, %p123
      %p125 = scmp.ne.s32.totalorder %s114, %s115
      %p126 = scmp.eq.s32.totalorder %s14, 0
      %p127 = por %p125, %p126
      %p128 = scmp.ne.s32.totalorder %s114, %s115
      %p129 = scmp.eq.s32.totalorder %s15, 20
      %p130 = por %p128, %p129
      %p132 = scmp.ne.s32.totalorder %s115, %s131
      %p133 = scmp.eq.s32.totalorder %s15, 0
      %p134 = por %p132, %p133
      %p135 = scmp.le.s32.totalorder 1, %s9
      %p136 = scmp.lt.s32.totalorder %s9, 22
      %p137 = pnand %p135, %p136
      %p138 = pneg %p137
      // Predicated region
      $region9: #{matmul_bias_act.1} parent=5 // pred_check
        _
      $region10: #{matmul_bias_act.1} parent=5 // pred_check_branch
        %140 = sbr.rel (%p137) target = $region12
      $region11: #{matmul_bias_act.1} parent=5 // pred_region
        %s141 = ssub.s32 %s9, 1
        // Predicated region
        $region13: #{matmul_bias_act.1} parent=11 // pred_check
          %p142 = pneg %p73
        $region14: #{matmul_bias_act.1} parent=11 // pred_check_branch
          %144 = sbr.rel (%p142) target = $region16
        $region15: #{matmul_bias_act.1} parent=11 // pred_region
          %p145 = scmp.lt.s32.totalorder %s19, 0
          %s146 = scalar_select %p145, %s19, 0
          %s147 = smul.addr %s146, 4
          %s148 = scalar_lea.vmem %s1, %s147
        $region16: #{matmul_bias_act.1} parent=11 // pred_fallthru
          _
        // Predicated region
        $region17: #{matmul_bias_act.1} parent=11 // pred_check
          %p149 = pneg %p99
        $region18: #{matmul_bias_act.1} parent=11 // pred_check_branch
          %151 = sbr.rel (%p149) target = $region20
        $region19: #{matmul_bias_act.1} parent=11 // pred_region
          %p152 = scmp.lt.s32.totalorder %s19, 0
          %s153 = scalar_select %p152, %s19, 0
          %s154 = scalar_lea.vmem %s2, %s153
        $region20: #{matmul_bias_act.1} parent=11 // pred_fallthru
          _
      $region12: #{matmul_bias_act.1} parent=5 // pred_fallthru
        _
      %p155 = scmp.lt.s32.totalorder %s9, 21
      // Predicated region
      $region21: #{matmul_bias_act.1} parent=5 // pred_check
        %p156 = pneg %p155
      $region22: #{matmul_bias_act.1} parent=5 // pred_check_branch
        %158 = sbr.rel (%p156) target = $region24
      $region23: #{matmul_bias_act.1} parent=5 // pred_region
        // Predicated region
        $region25: #{matmul_bias_act.1} parent=23 // pred_check
          %p159 = pneg %p41
        $region26: #{matmul_bias_act.1} parent=23 // pred_check_branch
          %161 = sbr.rel (%p159) target = $region28
        $region27: #{matmul_bias_act.1} parent=23 // pred_region
          %s162 = smul.u32 64, %s16
          %s163 = ssub.s32 1296, %s162
          %p164 = scmp.lt.s32.totalorder %s163, 64
          %s165 = scalar_select %p164, %s163, 64
          %s166 = smul.u32 4, %s165
          %p167 = scmp.lt.s32.totalorder %s162, 1295
          %s168 = scalar_select %p167, %s162, 1295
          %s169 = smul.addr %s168, 4
          %s170 = scalar_lea.vmem %s0, %s169
          %s171 = smul.u32 64, %s16
          %s172 = ssub.s32 1296, %s171
          %p173 = scmp.lt.s32.totalorder %s172, 64
          %s174 = scalar_select %p173, %s172, 64
          %s175 = smul.u32 4, %s174
        $region28: #{matmul_bias_act.1} parent=23 // pred_fallthru
          _
      $region24: #{matmul_bias_act.1} parent=5 // pred_fallthru
        _
      %p176 = scmp.le.s32.totalorder 1, %s9
      %p177 = scmp.lt.s32.totalorder %s9, 22
      %p178 = pnand %p176, %p177
      %p179 = pneg %p178
      // Predicated region
      $region29: #{matmul_bias_act.1} parent=5 // pred_check
        _
      $region30: #{matmul_bias_act.1} parent=5 // pred_check_branch
        %181 = sbr.rel (%p178) target = $region32
      $region31: #{matmul_bias_act.1} parent=5 // pred_region
        %s182 = ssub.s32 %s9, 1
        %s183 = smul.u32 64, %s18
        %s184 = ssub.s32 1296, %s183
        %p185 = scmp.lt.s32.totalorder %s184, 64
        %s186 = scalar_select %p185, %s184, 64
        %s187 = smul.u32 4, %s186
        %p188 = scmp.lt.s32.totalorder %s183, 1295
        %s189 = scalar_select %p188, %s183, 1295
        %s190 = smul.addr %s189, 4
        %s191 = scalar_lea.vmem %s0, %s190
        %p192 = pneg %p47
        %p193 = pneg %p44
        %p194 = scmp.lt.s32.totalorder %s19, 0
        %s195 = scalar_select %p194, %s19, 0
        %s196 = smul.addr %s195, 4
        %s197 = scalar_lea.vmem %s1, %s196
        %p198 = pneg %p73
        %p199 = pneg %p70
        %p200 = scmp.lt.s32.totalorder %s19, 0
        %s201 = scalar_select %p200, %s19, 0
        %s202 = scalar_lea.vmem %s2, %s201
        %p203 = pneg %p99
        %p204 = pneg %p96
        %p205 = pneg %p127
        %p206 = pneg %p124
        %s207 = sand.u32 %s114, 1
        %s208 = sand.u32 %s114, 1
        %s209 = smul.addr %s208, 256
        %s210 = scalar_lea.vmem [#allocation2], %s209
        %s211 = smul.u32 64, %s18
        %s212 = ssub.s32 1296, %s211
        %p213 = scmp.lt.s32.totalorder %s212, 64
        %s214 = scalar_select %p213, %s212, 64
        %s215 = smul.u32 4, %s214
        %p216 = scmp.lt.s32.totalorder %s211, 1295
        %s217 = scalar_select %p216, %s211, 1295
        %s218 = smul.addr %s217, 4
        %s219 = scalar_lea.vmem %s0, %s218
        %s220 = smul.u32 64, %s18
        %s221 = ssub.s32 1296, %s220
        %p222 = scmp.lt.s32.totalorder %s221, 64
        %s223 = scalar_select %p222, %s221, 64
        %s224 = smul.u32 4, %s223
        %p225 = scmp.lt.s32.totalorder %s19, 0
        %s226 = scalar_select %p225, %s19, 0
        %s227 = smul.addr %s226, 4
        %s228 = scalar_lea.vmem %s1, %s227
        %p229 = scmp.lt.s32.totalorder %s19, 0
        %s230 = scalar_select %p229, %s19, 0
        %s231 = scalar_lea.vmem %s2, %s230
        %s232 = smul.u32 64, %s18
        %s233 = ssub.s32 1296, %s232
        %p234 = scmp.lt.s32.totalorder %s233, 64
        %s235 = scalar_select %p234, %s233, 64
        %s236 = smul.u32 4, %s235
        %v238 = vld [vmem:[%s219] sm:$0xf]
        %v239 = vld [vmem:[%s219 + $0x4] sm:$0xf]
        %v240 = vld [vmem:[%s219 + $0x8] sm:$0xf]
        %v241 = vld [vmem:[%s219 + $0xc] sm:$0xf]
        %v242 = vld [vmem:[%s219 + $0x10] sm:$0xf]
        %v243 = vld [vmem:[%s219 + $0x14] sm:$0xf]
        %v244 = vld [vmem:[%s219 + $0x18] sm:$0xf]
        %v245 = vld [vmem:[%s219 + $0x1c] sm:$0xf]
        %v246 = vld [vmem:[%s219 + $0x20] sm:$0xf]
        %v247 = vld [vmem:[%s219 + $0x24] sm:$0xf]
        %v248 = vld [vmem:[%s219 + $0x28] sm:$0xf]
        %v249 = vld [vmem:[%s219 + $0x2c] sm:$0xf]
        %v250 = vld [vmem:[%s219 + $0x30] sm:$0xf]
        %v251 = vld [vmem:[%s219 + $0x34] sm:$0xf]
        %v252 = vld [vmem:[%s219 + $0x38] sm:$0xf]
        %v253 = vld [vmem:[%s219 + $0x3c] sm:$0xf]
        %v254 = vld [vmem:[%s219 + $0x40] sm:$0xf]
        %v255 = vld [vmem:[%s219 + $0x44] sm:$0xf]
        %v256 = vld [vmem:[%s219 + $0x48] sm:$0xf]
        %v257 = vld [vmem:[%s219 + $0x4c] sm:$0xf]
        %v258 = vld [vmem:[%s219 + $0x50] sm:$0xf]
        %v259 = vld [vmem:[%s219 + $0x54] sm:$0xf]
        %v260 = vld [vmem:[%s219 + $0x58] sm:$0xf]
        %v261 = vld [vmem:[%s219 + $0x5c] sm:$0xf]
        %v262 = vld [vmem:[%s219 + $0x60] sm:$0xf]
        %v263 = vld [vmem:[%s219 + $0x64] sm:$0xf]
        %v264 = vld [vmem:[%s219 + $0x68] sm:$0xf]
        %v265 = vld [vmem:[%s219 + $0x6c] sm:$0xf]
        %v266 = vld [vmem:[%s219 + $0x70] sm:$0xf]
        %v267 = vld [vmem:[%s219 + $0x74] sm:$0xf]
        %v268 = vld [vmem:[%s219 + $0x78] sm:$0xf]
        %v269 = vld [vmem:[%s219 + $0x7c] sm:$0xf]
        %v270 = vld [vmem:[%s219 + $0x80] sm:$0xf]
        %v271 = vld [vmem:[%s219 + $0x84] sm:$0xf]
        %v272 = vld [vmem:[%s219 + $0x88] sm:$0xf]
        %v273 = vld [vmem:[%s219 + $0x8c] sm:$0xf]
        %v274 = vld [vmem:[%s219 + $0x90] sm:$0xf]
        %v275 = vld [vmem:[%s219 + $0x94] sm:$0xf]
        %v276 = vld [vmem:[%s219 + $0x98] sm:$0xf]
        %v277 = vld [vmem:[%s219 + $0x9c] sm:$0xf]
        %v278 = vld [vmem:[%s219 + $0xa0] sm:$0xf]
        %v279 = vld [vmem:[%s219 + $0xa4] sm:$0xf]
        %v280 = vld [vmem:[%s219 + $0xa8] sm:$0xf]
        %v281 = vld [vmem:[%s219 + $0xac] sm:$0xf]
        %v282 = vld [vmem:[%s219 + $0xb0] sm:$0xf]
        %v283 = vld [vmem:[%s219 + $0xb4] sm:$0xf]
        %v284 = vld [vmem:[%s219 + $0xb8] sm:$0xf]
        %v285 = vld [vmem:[%s219 + $0xbc] sm:$0xf]
        %v286 = vld [vmem:[%s219 + $0xc0] sm:$0xf]
        %v287 = vld [vmem:[%s219 + $0xc4] sm:$0xf]
        %v288 = vld [vmem:[%s219 + $0xc8] sm:$0xf]
        %v289 = vld [vmem:[%s219 + $0xcc] sm:$0xf]
        %v290 = vld [vmem:[%s219 + $0xd0] sm:$0xf]
        %v291 = vld [vmem:[%s219 + $0xd4] sm:$0xf]
        %v292 = vld [vmem:[%s219 + $0xd8] sm:$0xf]
        %v293 = vld [vmem:[%s219 + $0xdc] sm:$0xf]
        %v294 = vld [vmem:[%s219 + $0xe0] sm:$0xf]
        %v295 = vld [vmem:[%s219 + $0xe4] sm:$0xf]
        %v296 = vld [vmem:[%s219 + $0xe8] sm:$0xf]
        %v297 = vld [vmem:[%s219 + $0xec] sm:$0xf]
        %v298 = vld [vmem:[%s219 + $0xf0] sm:$0xf]
        %v299 = vld [vmem:[%s219 + $0xf4] sm:$0xf]
        %v300 = vld [vmem:[%s219 + $0xf8] sm:$0xf]
        %v301 = vld [vmem:[%s219 + $0xfc] sm:$0xf]
        %v302 = vld [vmem:[%s228] sm:$0xf]
        %v303 = vld [vmem:[%s228 + $0x4] sm:$0xf]
        %v304 = vld [vmem:[%s228 + $0x8] sm:$0xf]
        %v305 = vld [vmem:[%s228 + $0xc] sm:$0xf]
        %v306 = vld [vmem:[%s231] sm:$0x1]
        %v308 = vperm.slane %v306, 0
        %v374 = vunpack.c.l.b16 %v238
        %v375 = vunpack.c.l.b16 %v239
        %v376 = vunpack.c.l.b16 %v240
        %v377 = vunpack.c.l.b16 %v241
        %v378 = vunpack.c.l.b16 %v242
        %v379 = vunpack.c.l.b16 %v243
        %v380 = vunpack.c.l.b16 %v244
        %v381 = vunpack.c.l.b16 %v245
        %v382 = vunpack.c.l.b16 %v246
        %v383 = vunpack.c.l.b16 %v247
        %v384 = vunpack.c.l.b16 %v248
        %v385 = vunpack.c.l.b16 %v249
        %v386 = vunpack.c.l.b16 %v250
        %v387 = vunpack.c.l.b16 %v251
        %v388 = vunpack.c.l.b16 %v252
        %v389 = vunpack.c.l.b16 %v253
        %v390 = vunpack.c.l.b16 %v254
        %v391 = vunpack.c.l.b16 %v255
        %v392 = vunpack.c.l.b16 %v256
        %v393 = vunpack.c.l.b16 %v257
        %v394 = vunpack.c.l.b16 %v258
        %v395 = vunpack.c.l.b16 %v259
        %v396 = vunpack.c.l.b16 %v260
        %v397 = vunpack.c.l.b16 %v261
        %v398 = vunpack.c.l.b16 %v262
        %v399 = vunpack.c.l.b16 %v263
        %v400 = vunpack.c.l.b16 %v264
        %v401 = vunpack.c.l.b16 %v265
        %v402 = vunpack.c.l.b16 %v266
        %v403 = vunpack.c.l.b16 %v267
        %v404 = vunpack.c.l.b16 %v268
        %v405 = vunpack.c.l.b16 %v269
        %v406 = vunpack.c.l.b16 %v270
        %v407 = vunpack.c.l.b16 %v271
        %v408 = vunpack.c.l.b16 %v272
        %v409 = vunpack.c.l.b16 %v273
        %v410 = vunpack.c.l.b16 %v274
        %v411 = vunpack.c.l.b16 %v275
        %v412 = vunpack.c.l.b16 %v276
        %v413 = vunpack.c.l.b16 %v277
        %v414 = vunpack.c.l.b16 %v278
        %v415 = vunpack.c.l.b16 %v279
        %v416 = vunpack.c.l.b16 %v280
        %v417 = vunpack.c.l.b16 %v281
        %v418 = vunpack.c.l.b16 %v282
        %v419 = vunpack.c.l.b16 %v283
        %v420 = vunpack.c.l.b16 %v284
        %v421 = vunpack.c.l.b16 %v285
        %v422 = vunpack.c.l.b16 %v286
        %v423 = vunpack.c.l.b16 %v287
        %v424 = vunpack.c.l.b16 %v288
        %v425 = vunpack.c.l.b16 %v289
        %v426 = vunpack.c.l.b16 %v290
        %v427 = vunpack.c.l.b16 %v291
        %v428 = vunpack.c.l.b16 %v292
        %v429 = vunpack.c.l.b16 %v293
        %v430 = vunpack.c.l.b16 %v294
        %v431 = vunpack.c.l.b16 %v295
        %v432 = vunpack.c.l.b16 %v296
        %v433 = vunpack.c.l.b16 %v297
        %v434 = vunpack.c.l.b16 %v298
        %v435 = vunpack.c.l.b16 %v299
        %v436 = vunpack.c.l.b16 %v300
        %v437 = vunpack.c.l.b16 %v301
        %v438 = vpack.c.b16 %v375, %v374
        %v439 = vpack.c.b16 %v377, %v376
        %v440 = vpack.c.b16 %v379, %v378
        %v441 = vpack.c.b16 %v381, %v380
        %v442 = vpack.c.b16 %v383, %v382
        %v443 = vpack.c.b16 %v385, %v384
        %v444 = vpack.c.b16 %v387, %v386
        %v445 = vpack.c.b16 %v389, %v388
        %v446 = vpack.c.b16 %v391, %v390
        %v447 = vpack.c.b16 %v393, %v392
        %v448 = vpack.c.b16 %v395, %v394
        %v449 = vpack.c.b16 %v397, %v396
        %v450 = vpack.c.b16 %v399, %v398
        %v451 = vpack.c.b16 %v401, %v400
        %v452 = vpack.c.b16 %v403, %v402
        %v453 = vpack.c.b16 %v405, %v404
        %v454 = vpack.c.b16 %v407, %v406
        %v455 = vpack.c.b16 %v409, %v408
        %v456 = vpack.c.b16 %v411, %v410
        %v457 = vpack.c.b16 %v413, %v412
        %v458 = vpack.c.b16 %v415, %v414
        %v459 = vpack.c.b16 %v417, %v416
        %v460 = vpack.c.b16 %v419, %v418
        %v461 = vpack.c.b16 %v421, %v420
        %v462 = vpack.c.b16 %v423, %v422
        %v463 = vpack.c.b16 %v425, %v424
        %v464 = vpack.c.b16 %v427, %v426
        %v465 = vpack.c.b16 %v429, %v428
        %v466 = vpack.c.b16 %v431, %v430
        %v467 = vpack.c.b16 %v433, %v432
        %v468 = vpack.c.b16 %v435, %v434
        %v469 = vpack.c.b16 %v437, %v436
        %v474 = vunpack.c.l.b16 %v302
        %v475 = vunpack.c.l.b16 %v303
        %v476 = vunpack.c.l.b16 %v304
        %v477 = vunpack.c.l.b16 %v305
        %v478 = vpack.c.b16 %v475, %v474
        %v479 = vpack.c.b16 %v477, %v476
        %vm482 = vcmask 261120
        %v484 = vsel %vm482, %v438, 0
        %v487 = vsel %vm482, %v439, 0
        %v490 = vsel %vm482, %v440, 0
        %v493 = vsel %vm482, %v441, 0
        %v496 = vsel %vm482, %v442, 0
        %v499 = vsel %vm482, %v443, 0
        %v502 = vsel %vm482, %v444, 0
        %v505 = vsel %vm482, %v445, 0
        %v508 = vsel %vm482, %v446, 0
        %v511 = vsel %vm482, %v447, 0
        %v514 = vsel %vm482, %v448, 0
        %v517 = vsel %vm482, %v449, 0
        %v520 = vsel %vm482, %v450, 0
        %v523 = vsel %vm482, %v451, 0
        %v526 = vsel %vm482, %v452, 0
        %v529 = vsel %vm482, %v453, 0
        %v532 = vsel %vm482, %v454, 0
        %v535 = vsel %vm482, %v455, 0
        %v538 = vsel %vm482, %v456, 0
        %v541 = vsel %vm482, %v457, 0
        %v544 = vsel %vm482, %v458, 0
        %v547 = vsel %vm482, %v459, 0
        %v550 = vsel %vm482, %v460, 0
        %v553 = vsel %vm482, %v461, 0
        %v556 = vsel %vm482, %v462, 0
        %v559 = vsel %vm482, %v463, 0
        %v562 = vsel %vm482, %v464, 0
        %v565 = vsel %vm482, %v465, 0
        %v568 = vsel %vm482, %v466, 0
        %v571 = vsel %vm482, %v467, 0
        %v574 = vsel %vm482, %v468, 0
        %v577 = vsel %vm482, %v469, 0
        %579 = vmatpush.bf16.msra.mxu0 0
        %580 = vmatpush.bf16.msra.mxu0 0
        %581 = vmatpush.bf16.msra.mxu0 0
        %582 = vmatpush.bf16.msra.mxu0 0
        %583 = vmatpush.bf16.msra.mxu0 0
        %584 = vmatpush.bf16.msra.mxu0 0
        %585 = vmatpush.bf16.msra.mxu0 %v479
        %586 = vmatpush.bf16.msra.mxu0 %v478
        %587 = vmatmul.bf16.gmra.mxu0 %v484
        %v588 = vpop.f32.mrf.mxu0
        %v589 = vadd.f32 %v308, %v588
        %v590 = vpop.f32.mrf.mxu0
        %v591 = vadd.f32 %v308, %v590
        %592 = vmatmul.bf16.gmra.mxu0 %v487
        %v593 = vpop.f32.mrf.mxu0
        %v594 = vadd.f32 %v308, %v593
        %v595 = vpop.f32.mrf.mxu0
        %v596 = vadd.f32 %v308, %v595
        %597 = vmatmul.bf16.gmra.mxu0 %v490
        %v598 = vpop.f32.mrf.mxu0
        %v599 = vadd.f32 %v308, %v598
        %v600 = vpop.f32.mrf.mxu0
        %v601 = vadd.f32 %v308, %v600
        %602 = vmatmul.bf16.gmra.mxu0 %v493
        %v603 = vpop.f32.mrf.mxu0
        %v604 = vadd.f32 %v308, %v603
        %v605 = vpop.f32.mrf.mxu0
        %v606 = vadd.f32 %v308, %v605
        %607 = vmatmul.bf16.gmra.mxu0 %v496
        %v608 = vpop.f32.mrf.mxu0
        %v609 = vadd.f32 %v308, %v608
        %v610 = vpop.f32.mrf.mxu0
        %v611 = vadd.f32 %v308, %v610
        %612 = vmatmul.bf16.gmra.mxu0 %v499
        %v613 = vpop.f32.mrf.mxu0
        %v614 = vadd.f32 %v308, %v613
        %v615 = vpop.f32.mrf.mxu0
        %v616 = vadd.f32 %v308, %v615
        %617 = vmatmul.bf16.gmra.mxu0 %v502
        %v618 = vpop.f32.mrf.mxu0
        %v619 = vadd.f32 %v308, %v618
        %v620 = vpop.f32.mrf.mxu0
        %v621 = vadd.f32 %v308, %v620
        %622 = vmatmul.bf16.gmra.mxu0 %v505
        %v623 = vpop.f32.mrf.mxu0
        %v624 = vadd.f32 %v308, %v623
        %v625 = vpop.f32.mrf.mxu0
        %v626 = vadd.f32 %v308, %v625
        %627 = vmatmul.bf16.gmra.mxu0 %v508
        %v628 = vpop.f32.mrf.mxu0
        %v629 = vadd.f32 %v308, %v628
        %v630 = vpop.f32.mrf.mxu0
        %v631 = vadd.f32 %v308, %v630
        %632 = vmatmul.bf16.gmra.mxu0 %v511
        %v633 = vpop.f32.mrf.mxu0
        %v634 = vadd.f32 %v308, %v633
        %v635 = vpop.f32.mrf.mxu0
        %v636 = vadd.f32 %v308, %v635
        %637 = vmatmul.bf16.gmra.mxu0 %v514
        %v638 = vpop.f32.mrf.mxu0
        %v639 = vadd.f32 %v308, %v638
        %v640 = vpop.f32.mrf.mxu0
        %v641 = vadd.f32 %v308, %v640
        %642 = vmatmul.bf16.gmra.mxu0 %v517
        %v643 = vpop.f32.mrf.mxu0
        %v644 = vadd.f32 %v308, %v643
        %v645 = vpop.f32.mrf.mxu0
        %v646 = vadd.f32 %v308, %v645
        %647 = vmatmul.bf16.gmra.mxu0 %v520
        %v648 = vpop.f32.mrf.mxu0
        %v649 = vadd.f32 %v308, %v648
        %v650 = vpop.f32.mrf.mxu0
        %v651 = vadd.f32 %v308, %v650
        %652 = vmatmul.bf16.gmra.mxu0 %v523
        %v653 = vpop.f32.mrf.mxu0
        %v654 = vadd.f32 %v308, %v653
        %v655 = vpop.f32.mrf.mxu0
        %v656 = vadd.f32 %v308, %v655
        %657 = vmatmul.bf16.gmra.mxu0 %v526
        %v658 = vpop.f32.mrf.mxu0
        %v659 = vadd.f32 %v308, %v658
        %v660 = vpop.f32.mrf.mxu0
        %v661 = vadd.f32 %v308, %v660
        %662 = vmatmul.bf16.gmra.mxu0 %v529
        %v663 = vpop.f32.mrf.mxu0
        %v664 = vadd.f32 %v308, %v663
        %v665 = vpop.f32.mrf.mxu0
        %v666 = vadd.f32 %v308, %v665
        %667 = vmatmul.bf16.gmra.mxu0 %v532
        %v668 = vpop.f32.mrf.mxu0
        %v669 = vadd.f32 %v308, %v668
        %v670 = vpop.f32.mrf.mxu0
        %v671 = vadd.f32 %v308, %v670
        %672 = vmatmul.bf16.gmra.mxu0 %v535
        %v673 = vpop.f32.mrf.mxu0
        %v674 = vadd.f32 %v308, %v673
        %v675 = vpop.f32.mrf.mxu0
        %v676 = vadd.f32 %v308, %v675
        %677 = vmatmul.bf16.gmra.mxu0 %v538
        %v678 = vpop.f32.mrf.mxu0
        %v679 = vadd.f32 %v308, %v678
        %v680 = vpop.f32.mrf.mxu0
        %v681 = vadd.f32 %v308, %v680
        %682 = vmatmul.bf16.gmra.mxu0 %v541
        %v683 = vpop.f32.mrf.mxu0
        %v684 = vadd.f32 %v308, %v683
        %v685 = vpop.f32.mrf.mxu0
        %v686 = vadd.f32 %v308, %v685
        %687 = vmatmul.bf16.gmra.mxu0 %v544
        %v688 = vpop.f32.mrf.mxu0
        %v689 = vadd.f32 %v308, %v688
        %v690 = vpop.f32.mrf.mxu0
        %v691 = vadd.f32 %v308, %v690
        %692 = vmatmul.bf16.gmra.mxu0 %v547
        %v693 = vpop.f32.mrf.mxu0
        %v694 = vadd.f32 %v308, %v693
        %v695 = vpop.f32.mrf.mxu0
        %v696 = vadd.f32 %v308, %v695
        %697 = vmatmul.bf16.gmra.mxu0 %v550
        %v698 = vpop.f32.mrf.mxu0
        %v699 = vadd.f32 %v308, %v698
        %v700 = vpop.f32.mrf.mxu0
        %v701 = vadd.f32 %v308, %v700
        %702 = vmatmul.bf16.gmra.mxu0 %v553
        %v703 = vpop.f32.mrf.mxu0
        %v704 = vadd.f32 %v308, %v703
        %v705 = vpop.f32.mrf.mxu0
        %v706 = vadd.f32 %v308, %v705
        %707 = vmatmul.bf16.gmra.mxu0 %v556
        %v708 = vpop.f32.mrf.mxu0
        %v709 = vadd.f32 %v308, %v708
        %v710 = vpop.f32.mrf.mxu0
        %v711 = vadd.f32 %v308, %v710
        %712 = vmatmul.bf16.gmra.mxu0 %v559
        %v713 = vpop.f32.mrf.mxu0
        %v714 = vadd.f32 %v308, %v713
        %v715 = vpop.f32.mrf.mxu0
        %v716 = vadd.f32 %v308, %v715
        %717 = vmatmul.bf16.gmra.mxu0 %v562
        %v718 = vpop.f32.mrf.mxu0
        %v719 = vadd.f32 %v308, %v718
        %v720 = vpop.f32.mrf.mxu0
        %v721 = vadd.f32 %v308, %v720
        %722 = vmatmul.bf16.gmra.mxu0 %v565
        %v723 = vpop.f32.mrf.mxu0
        %v724 = vadd.f32 %v308, %v723
        %v725 = vpop.f32.mrf.mxu0
        %v726 = vadd.f32 %v308, %v725
        %727 = vmatmul.bf16.gmra.mxu0 %v568
        %v728 = vpop.f32.mrf.mxu0
        %v729 = vadd.f32 %v308, %v728
        %v730 = vpop.f32.mrf.mxu0
        %v731 = vadd.f32 %v308, %v730
        %732 = vmatmul.bf16.gmra.mxu0 %v571
        %v733 = vpop.f32.mrf.mxu0
        %v734 = vadd.f32 %v308, %v733
        %v735 = vpop.f32.mrf.mxu0
        %v736 = vadd.f32 %v308, %v735
        %737 = vmatmul.bf16.gmra.mxu0 %v574
        %v738 = vpop.f32.mrf.mxu0
        %v739 = vadd.f32 %v308, %v738
        %v740 = vpop.f32.mrf.mxu0
        %v741 = vadd.f32 %v308, %v740
        %742 = vmatmul.bf16.gmra.mxu0 %v577
        %v743 = vpop.f32.mrf.mxu0
        %v744 = vadd.f32 %v308, %v743
        %v745 = vpop.f32.mrf.mxu0
        %v746 = vadd.f32 %v308, %v745
        %747 = vdwg.mxu0
        %vm748 = vcmp.ge.f32.partialorder %v589, 0.0
        %vm749 = vcmp.ge.f32.partialorder %v591, 0.0
        %vm750 = vcmp.ge.f32.partialorder %v594, 0.0
        %vm751 = vcmp.ge.f32.partialorder %v596, 0.0
        %vm752 = vcmp.ge.f32.partialorder %v599, 0.0
        %vm753 = vcmp.ge.f32.partialorder %v601, 0.0
        %vm754 = vcmp.ge.f32.partialorder %v604, 0.0
        %vm755 = vcmp.ge.f32.partialorder %v606, 0.0
        %vm756 = vcmp.ge.f32.partialorder %v609, 0.0
        %vm757 = vcmp.ge.f32.partialorder %v611, 0.0
        %vm758 = vcmp.ge.f32.partialorder %v614, 0.0
        %vm759 = vcmp.ge.f32.partialorder %v616, 0.0
        %vm760 = vcmp.ge.f32.partialorder %v619, 0.0
        %vm761 = vcmp.ge.f32.partialorder %v621, 0.0
        %vm762 = vcmp.ge.f32.partialorder %v624, 0.0
        %vm763 = vcmp.ge.f32.partialorder %v626, 0.0
        %vm764 = vcmp.ge.f32.partialorder %v629, 0.0
        %vm765 = vcmp.ge.f32.partialorder %v631, 0.0
        %vm766 = vcmp.ge.f32.partialorder %v634, 0.0
        %vm767 = vcmp.ge.f32.partialorder %v636, 0.0
        %vm768 = vcmp.ge.f32.partialorder %v639, 0.0
        %vm769 = vcmp.ge.f32.partialorder %v641, 0.0
        %vm770 = vcmp.ge.f32.partialorder %v644, 0.0
        %vm771 = vcmp.ge.f32.partialorder %v646, 0.0
        %vm772 = vcmp.ge.f32.partialorder %v649, 0.0
        %vm773 = vcmp.ge.f32.partialorder %v651, 0.0
        %vm774 = vcmp.ge.f32.partialorder %v654, 0.0
        %vm775 = vcmp.ge.f32.partialorder %v656, 0.0
        %vm776 = vcmp.ge.f32.partialorder %v659, 0.0
        %vm777 = vcmp.ge.f32.partialorder %v661, 0.0
        %vm778 = vcmp.ge.f32.partialorder %v664, 0.0
        %vm779 = vcmp.ge.f32.partialorder %v666, 0.0
        %vm780 = vcmp.ge.f32.partialorder %v669, 0.0
        %vm781 = vcmp.ge.f32.partialorder %v671, 0.0
        %vm782 = vcmp.ge.f32.partialorder %v674, 0.0
        %vm783 = vcmp.ge.f32.partialorder %v676, 0.0
        %vm784 = vcmp.ge.f32.partialorder %v679, 0.0
        %vm785 = vcmp.ge.f32.partialorder %v681, 0.0
        %vm786 = vcmp.ge.f32.partialorder %v684, 0.0
        %vm787 = vcmp.ge.f32.partialorder %v686, 0.0
        %vm788 = vcmp.ge.f32.partialorder %v689, 0.0
        %vm789 = vcmp.ge.f32.partialorder %v691, 0.0
        %vm790 = vcmp.ge.f32.partialorder %v694, 0.0
        %vm791 = vcmp.ge.f32.partialorder %v696, 0.0
        %vm792 = vcmp.ge.f32.partialorder %v699, 0.0
        %vm793 = vcmp.ge.f32.partialorder %v701, 0.0
        %vm794 = vcmp.ge.f32.partialorder %v704, 0.0
        %vm795 = vcmp.ge.f32.partialorder %v706, 0.0
        %vm796 = vcmp.ge.f32.partialorder %v709, 0.0
        %vm797 = vcmp.ge.f32.partialorder %v711, 0.0
        %vm798 = vcmp.ge.f32.partialorder %v714, 0.0
        %vm799 = vcmp.ge.f32.partialorder %v716, 0.0
        %vm800 = vcmp.ge.f32.partialorder %v719, 0.0
        %vm801 = vcmp.ge.f32.partialorder %v721, 0.0
        %vm802 = vcmp.ge.f32.partialorder %v724, 0.0
        %vm803 = vcmp.ge.f32.partialorder %v726, 0.0
        %vm804 = vcmp.ge.f32.partialorder %v729, 0.0
        %vm805 = vcmp.ge.f32.partialorder %v731, 0.0
        %vm806 = vcmp.ge.f32.partialorder %v734, 0.0
        %vm807 = vcmp.ge.f32.partialorder %v736, 0.0
        %vm808 = vcmp.ge.f32.partialorder %v739, 0.0
        %vm809 = vcmp.ge.f32.partialorder %v741, 0.0
        %vm810 = vcmp.ge.f32.partialorder %v744, 0.0
        %vm811 = vcmp.ge.f32.partialorder %v746, 0.0
        %v812 = vmul.f32 %v589, 0.1
        %v813 = vmul.f32 %v591, 0.1
        %v814 = vmul.f32 %v594, 0.1
        %v815 = vmul.f32 %v596, 0.1
        %v816 = vmul.f32 %v599, 0.1
        %v817 = vmul.f32 %v601, 0.1
        %v818 = vmul.f32 %v604, 0.1
        %v819 = vmul.f32 %v606, 0.1
        %v820 = vmul.f32 %v609, 0.1
        %v821 = vmul.f32 %v611, 0.1
        %v822 = vmul.f32 %v614, 0.1
        %v823 = vmul.f32 %v616, 0.1
        %v824 = vmul.f32 %v619, 0.1
        %v825 = vmul.f32 %v621, 0.1
        %v826 = vmul.f32 %v624, 0.1
        %v827 = vmul.f32 %v626, 0.1
        %v828 = vmul.f32 %v629, 0.1
        %v829 = vmul.f32 %v631, 0.1
        %v830 = vmul.f32 %v634, 0.1
        %v831 = vmul.f32 %v636, 0.1
        %v832 = vmul.f32 %v639, 0.1
        %v833 = vmul.f32 %v641, 0.1
        %v834 = vmul.f32 %v644, 0.1
        %v835 = vmul.f32 %v646, 0.1
        %v836 = vmul.f32 %v649, 0.1
        %v837 = vmul.f32 %v651, 0.1
        %v838 = vmul.f32 %v654, 0.1
        %v839 = vmul.f32 %v656, 0.1
        %v840 = vmul.f32 %v659, 0.1
        %v841 = vmul.f32 %v661, 0.1
        %v842 = vmul.f32 %v664, 0.1
        %v843 = vmul.f32 %v666, 0.1
        %v844 = vmul.f32 %v669, 0.1
        %v845 = vmul.f32 %v671, 0.1
        %v846 = vmul.f32 %v674, 0.1
        %v847 = vmul.f32 %v676, 0.1
        %v848 = vmul.f32 %v679, 0.1
        %v849 = vmul.f32 %v681, 0.1
        %v850 = vmul.f32 %v684, 0.1
        %v851 = vmul.f32 %v686, 0.1
        %v852 = vmul.f32 %v689, 0.1
        %v853 = vmul.f32 %v691, 0.1
        %v854 = vmul.f32 %v694, 0.1
        %v855 = vmul.f32 %v696, 0.1
        %v856 = vmul.f32 %v699, 0.1
        %v857 = vmul.f32 %v701, 0.1
        %v858 = vmul.f32 %v704, 0.1
        %v859 = vmul.f32 %v706, 0.1
        %v860 = vmul.f32 %v709, 0.1
        %v861 = vmul.f32 %v711, 0.1
        %v862 = vmul.f32 %v714, 0.1
        %v863 = vmul.f32 %v716, 0.1
        %v864 = vmul.f32 %v719, 0.1
        %v865 = vmul.f32 %v721, 0.1
        %v866 = vmul.f32 %v724, 0.1
        %v867 = vmul.f32 %v726, 0.1
        %v868 = vmul.f32 %v729, 0.1
        %v869 = vmul.f32 %v731, 0.1
        %v870 = vmul.f32 %v734, 0.1
        %v871 = vmul.f32 %v736, 0.1
        %v872 = vmul.f32 %v739, 0.1
        %v873 = vmul.f32 %v741, 0.1
        %v874 = vmul.f32 %v744, 0.1
        %v875 = vmul.f32 %v746, 0.1
        %v876 = vsel %vm748, %v589, %v812
        %v877 = vsel %vm749, %v591, %v813
        %v878 = vsel %vm750, %v594, %v814
        %v879 = vsel %vm751, %v596, %v815
        %v880 = vsel %vm752, %v599, %v816
        %v881 = vsel %vm753, %v601, %v817
        %v882 = vsel %vm754, %v604, %v818
        %v883 = vsel %vm755, %v606, %v819
        %v884 = vsel %vm756, %v609, %v820
        %v885 = vsel %vm757, %v611, %v821
        %v886 = vsel %vm758, %v614, %v822
        %v887 = vsel %vm759, %v616, %v823
        %v888 = vsel %vm760, %v619, %v824
        %v889 = vsel %vm761, %v621, %v825
        %v890 = vsel %vm762, %v624, %v826
        %v891 = vsel %vm763, %v626, %v827
        %v892 = vsel %vm764, %v629, %v828
        %v893 = vsel %vm765, %v631, %v829
        %v894 = vsel %vm766, %v634, %v830
        %v895 = vsel %vm767, %v636, %v831
        %v896 = vsel %vm768, %v639, %v832
        %v897 = vsel %vm769, %v641, %v833
        %v898 = vsel %vm770, %v644, %v834
        %v899 = vsel %vm771, %v646, %v835
        %v900 = vsel %vm772, %v649, %v836
        %v901 = vsel %vm773, %v651, %v837
        %v902 = vsel %vm774, %v654, %v838
        %v903 = vsel %vm775, %v656, %v839
        %v904 = vsel %vm776, %v659, %v840
        %v905 = vsel %vm777, %v661, %v841
        %v906 = vsel %vm778, %v664, %v842
        %v907 = vsel %vm779, %v666, %v843
        %v908 = vsel %vm780, %v669, %v844
        %v909 = vsel %vm781, %v671, %v845
        %v910 = vsel %vm782, %v674, %v846
        %v911 = vsel %vm783, %v676, %v847
        %v912 = vsel %vm784, %v679, %v848
        %v913 = vsel %vm785, %v681, %v849
        %v914 = vsel %vm786, %v684, %v850
        %v915 = vsel %vm787, %v686, %v851
        %v916 = vsel %vm788, %v689, %v852
        %v917 = vsel %vm789, %v691, %v853
        %v918 = vsel %vm790, %v694, %v854
        %v919 = vsel %vm791, %v696, %v855
        %v920 = vsel %vm792, %v699, %v856
        %v921 = vsel %vm793, %v701, %v857
        %v922 = vsel %vm794, %v704, %v858
        %v923 = vsel %vm795, %v706, %v859
        %v924 = vsel %vm796, %v709, %v860
        %v925 = vsel %vm797, %v711, %v861
        %v926 = vsel %vm798, %v714, %v862
        %v927 = vsel %vm799, %v716, %v863
        %v928 = vsel %vm800, %v719, %v864
        %v929 = vsel %vm801, %v721, %v865
        %v930 = vsel %vm802, %v724, %v866
        %v931 = vsel %vm803, %v726, %v867
        %v932 = vsel %vm804, %v729, %v868
        %v933 = vsel %vm805, %v731, %v869
        %v934 = vsel %vm806, %v734, %v870
        %v935 = vsel %vm807, %v736, %v871
        %v936 = vsel %vm808, %v739, %v872
        %v937 = vsel %vm809, %v741, %v873
        %v938 = vsel %vm810, %v744, %v874
        %v939 = vsel %vm811, %v746, %v875
        %v940 = vpack.c.bf16 %v876, %v876
        %v941 = vpack.c.bf16 %v877, %v877
        %v942 = vpack.c.bf16 %v878, %v878
        %v943 = vpack.c.bf16 %v879, %v879
        %v944 = vpack.c.bf16 %v880, %v880
        %v945 = vpack.c.bf16 %v881, %v881
        %v946 = vpack.c.bf16 %v882, %v882
        %v947 = vpack.c.bf16 %v883, %v883
        %v948 = vpack.c.bf16 %v884, %v884
        %v949 = vpack.c.bf16 %v885, %v885
        %v950 = vpack.c.bf16 %v886, %v886
        %v951 = vpack.c.bf16 %v887, %v887
        %v952 = vpack.c.bf16 %v888, %v888
        %v953 = vpack.c.bf16 %v889, %v889
        %v954 = vpack.c.bf16 %v890, %v890
        %v955 = vpack.c.bf16 %v891, %v891
        %v956 = vpack.c.bf16 %v892, %v892
        %v957 = vpack.c.bf16 %v893, %v893
        %v958 = vpack.c.bf16 %v894, %v894
        %v959 = vpack.c.bf16 %v895, %v895
        %v960 = vpack.c.bf16 %v896, %v896
        %v961 = vpack.c.bf16 %v897, %v897
        %v962 = vpack.c.bf16 %v898, %v898
        %v963 = vpack.c.bf16 %v899, %v899
        %v964 = vpack.c.bf16 %v900, %v900
        %v965 = vpack.c.bf16 %v901, %v901
        %v966 = vpack.c.bf16 %v902, %v902
        %v967 = vpack.c.bf16 %v903, %v903
        %v968 = vpack.c.bf16 %v904, %v904
        %v969 = vpack.c.bf16 %v905, %v905
        %v970 = vpack.c.bf16 %v906, %v906
        %v971 = vpack.c.bf16 %v907, %v907
        %v972 = vpack.c.bf16 %v908, %v908
        %v973 = vpack.c.bf16 %v909, %v909
        %v974 = vpack.c.bf16 %v910, %v910
        %v975 = vpack.c.bf16 %v911, %v911
        %v976 = vpack.c.bf16 %v912, %v912
        %v977 = vpack.c.bf16 %v913, %v913
        %v978 = vpack.c.bf16 %v914, %v914
        %v979 = vpack.c.bf16 %v915, %v915
        %v980 = vpack.c.bf16 %v916, %v916
        %v981 = vpack.c.bf16 %v917, %v917
        %v982 = vpack.c.bf16 %v918, %v918
        %v983 = vpack.c.bf16 %v919, %v919
        %v984 = vpack.c.bf16 %v920, %v920
        %v985 = vpack.c.bf16 %v921, %v921
        %v986 = vpack.c.bf16 %v922, %v922
        %v987 = vpack.c.bf16 %v923, %v923
        %v988 = vpack.c.bf16 %v924, %v924
        %v989 = vpack.c.bf16 %v925, %v925
        %v990 = vpack.c.bf16 %v926, %v926
        %v991 = vpack.c.bf16 %v927, %v927
        %v992 = vpack.c.bf16 %v928, %v928
        %v993 = vpack.c.bf16 %v929, %v929
        %v994 = vpack.c.bf16 %v930, %v930
        %v995 = vpack.c.bf16 %v931, %v931
        %v996 = vpack.c.bf16 %v932, %v932
        %v997 = vpack.c.bf16 %v933, %v933
        %v998 = vpack.c.bf16 %v934, %v934
        %v999 = vpack.c.bf16 %v935, %v935
        %v1000 = vpack.c.bf16 %v936, %v936
        %v1001 = vpack.c.bf16 %v937, %v937
        %v1002 = vpack.c.bf16 %v938, %v938
        %v1003 = vpack.c.bf16 %v939, %v939
        %1004 = vst [vmem:[%s210] sm:$0xf] %v940
        %1005 = vst [vmem:[%s210 + $0x4] sm:$0xf] %v941
        %1006 = vst [vmem:[%s210 + $0x8] sm:$0xf] %v942
        %1007 = vst [vmem:[%s210 + $0xc] sm:$0xf] %v943
        %1008 = vst [vmem:[%s210 + $0x10] sm:$0xf] %v944
        %1009 = vst [vmem:[%s210 + $0x14] sm:$0xf] %v945
        %1010 = vst [vmem:[%s210 + $0x18] sm:$0xf] %v946
        %1011 = vst [vmem:[%s210 + $0x1c] sm:$0xf] %v947
        %1012 = vst [vmem:[%s210 + $0x20] sm:$0xf] %v948
        %1013 = vst [vmem:[%s210 + $0x24] sm:$0xf] %v949
        %1014 = vst [vmem:[%s210 + $0x28] sm:$0xf] %v950
        %1015 = vst [vmem:[%s210 + $0x2c] sm:$0xf] %v951
        %1016 = vst [vmem:[%s210 + $0x30] sm:$0xf] %v952
        %1017 = vst [vmem:[%s210 + $0x34] sm:$0xf] %v953
        %1018 = vst [vmem:[%s210 + $0x38] sm:$0xf] %v954
        %1019 = vst [vmem:[%s210 + $0x3c] sm:$0xf] %v955
        %1020 = vst [vmem:[%s210 + $0x40] sm:$0xf] %v956
        %1021 = vst [vmem:[%s210 + $0x44] sm:$0xf] %v957
        %1022 = vst [vmem:[%s210 + $0x48] sm:$0xf] %v958
        %1023 = vst [vmem:[%s210 + $0x4c] sm:$0xf] %v959
        %1024 = vst [vmem:[%s210 + $0x50] sm:$0xf] %v960
        %1025 = vst [vmem:[%s210 + $0x54] sm:$0xf] %v961
        %1026 = vst [vmem:[%s210 + $0x58] sm:$0xf] %v962
        %1027 = vst [vmem:[%s210 + $0x5c] sm:$0xf] %v963
        %1028 = vst [vmem:[%s210 + $0x60] sm:$0xf] %v964
        %1029 = vst [vmem:[%s210 + $0x64] sm:$0xf] %v965
        %1030 = vst [vmem:[%s210 + $0x68] sm:$0xf] %v966
        %1031 = vst [vmem:[%s210 + $0x6c] sm:$0xf] %v967
        %1032 = vst [vmem:[%s210 + $0x70] sm:$0xf] %v968
        %1033 = vst [vmem:[%s210 + $0x74] sm:$0xf] %v969
        %1034 = vst [vmem:[%s210 + $0x78] sm:$0xf] %v970
        %1035 = vst [vmem:[%s210 + $0x7c] sm:$0xf] %v971
        %1036 = vst [vmem:[%s210 + $0x80] sm:$0xf] %v972
        %1037 = vst [vmem:[%s210 + $0x84] sm:$0xf] %v973
        %1038 = vst [vmem:[%s210 + $0x88] sm:$0xf] %v974
        %1039 = vst [vmem:[%s210 + $0x8c] sm:$0xf] %v975
        %1040 = vst [vmem:[%s210 + $0x90] sm:$0xf] %v976
        %1041 = vst [vmem:[%s210 + $0x94] sm:$0xf] %v977
        %1042 = vst [vmem:[%s210 + $0x98] sm:$0xf] %v978
        %1043 = vst [vmem:[%s210 + $0x9c] sm:$0xf] %v979
        %1044 = vst [vmem:[%s210 + $0xa0] sm:$0xf] %v980
        %1045 = vst [vmem:[%s210 + $0xa4] sm:$0xf] %v981
        %1046 = vst [vmem:[%s210 + $0xa8] sm:$0xf] %v982
        %1047 = vst [vmem:[%s210 + $0xac] sm:$0xf] %v983
        %1048 = vst [vmem:[%s210 + $0xb0] sm:$0xf] %v984
        %1049 = vst [vmem:[%s210 + $0xb4] sm:$0xf] %v985
        %1050 = vst [vmem:[%s210 + $0xb8] sm:$0xf] %v986
        %1051 = vst [vmem:[%s210 + $0xbc] sm:$0xf] %v987
        %1052 = vst [vmem:[%s210 + $0xc0] sm:$0xf] %v988
        %1053 = vst [vmem:[%s210 + $0xc4] sm:$0xf] %v989
        %1054 = vst [vmem:[%s210 + $0xc8] sm:$0xf] %v990
        %1055 = vst [vmem:[%s210 + $0xcc] sm:$0xf] %v991
        %1056 = vst [vmem:[%s210 + $0xd0] sm:$0xf] %v992
        %1057 = vst [vmem:[%s210 + $0xd4] sm:$0xf] %v993
        %1058 = vst [vmem:[%s210 + $0xd8] sm:$0xf] %v994
        %1059 = vst [vmem:[%s210 + $0xdc] sm:$0xf] %v995
        %1060 = vst [vmem:[%s210 + $0xe0] sm:$0xf] %v996
        %1061 = vst [vmem:[%s210 + $0xe4] sm:$0xf] %v997
        %1062 = vst [vmem:[%s210 + $0xe8] sm:$0xf] %v998
        %1063 = vst [vmem:[%s210 + $0xec] sm:$0xf] %v999
        %1064 = vst [vmem:[%s210 + $0xf0] sm:$0xf] %v1000
        %1065 = vst [vmem:[%s210 + $0xf4] sm:$0xf] %v1001
        %1066 = vst [vmem:[%s210 + $0xf8] sm:$0xf] %v1002
        %1067 = vst [vmem:[%s210 + $0xfc] sm:$0xf] %v1003
        %s1068 = sand.u32 %s114, 1
        %s1069 = sand.u32 %s114, 1
        %s1070 = smul.addr %s1069, 256
        %s1071 = scalar_lea.vmem [#allocation2], %s1070
        // Predicated region
        $region33: #{matmul_bias_act.1} parent=31 // pred_check
          %p1072 = pneg %p124
        $region34: #{matmul_bias_act.1} parent=31 // pred_check_branch
          %1074 = sbr.rel (%p1072) target = $region36
        $region35: #{matmul_bias_act.1} parent=31 // pred_region
          %s1075 = smul.u32 64, %s18
          %s1076 = ssub.s32 1296, %s1075
          %p1077 = scmp.lt.s32.totalorder %s1076, 64
          %s1078 = scalar_select %p1077, %s1076, 64
          %s1079 = smul.u32 4, %s1078
          %p1080 = scmp.ne.s32.totalorder 0, %s1079
          %s1081 = sadd.s32 %s19, %s1075
          %s1082 = smul.addr %s1081, 4
          %s1083 = scalar_lea.vmem %s3, %s1082
          // Predicated region
          $region37: #{matmul_bias_act.1} parent=35 // pred_check
            %p1084 = pneg %p1080
          $region38: #{matmul_bias_act.1} parent=35 // pred_check_branch
            %1086 = sbr.rel (%p1084) target = $region40
          $region39: #{matmul_bias_act.1} parent=35 // pred_region
            // Predicated region
            $region41: #{matmul_bias_act.1} parent=39 // pred_check
              _
            $region42: #{matmul_bias_act.1} parent=39 // pred_check_branch
              %1088 = sbr.rel target = $region44
            $region43: #{matmul_bias_act.1} parent=39 // pred_region
              // Predicated region
              $region63: #{matmul_bias_act.1} parent=43 // pred_check
                _
              $region64: #{matmul_bias_act.1} parent=43 // pred_check_branch
                %1200 = sbr.rel (0) target = $region66
              $region65: #{matmul_bias_act.1} parent=43 // pred_region
                %s1202 = ssub.s32 16, 1
                %s1203 = sshrl.u32 %s1078, 5
                // While loop
                $region67: #{matmul_bias_act.1} parent=65 // loop_pre_header
                  _
                $region68: #{matmul_bias_act.1} parent=65 // loop_header
                  %s1205 = sphi 0, %s1207
                  %p1206 = scmp.ge.s32.totalorder %s1205, %s1203
                  %s1210 = sphi 0, %s1279
                  %s1211 = sphi %s1071, %s1282
                  %s1212 = sphi %s1083, %s1283
                $region69: #{matmul_bias_act.1} parent=65 // loop_header_branch
                  %1209 = sbr.rel (%p1206) target = $region73
                $region70: #{matmul_bias_act.1} parent=65 // loop_body
                  %v1213 = vld [vmem:[%s1211] sm:%s1202]
                  %1214 = vst [vmem:[%s1212] sm:%s1202] %v1213
                  %v1215 = vld [vmem:[%s1211 + $0x4] sm:%s1202]
                  %1216 = vst [vmem:[%s1212 + $0x4] sm:%s1202] %v1215
                  %v1217 = vld [vmem:[%s1211 + $0x8] sm:%s1202]
                  %1218 = vst [vmem:[%s1212 + $0x8] sm:%s1202] %v1217
                  %v1219 = vld [vmem:[%s1211 + $0xc] sm:%s1202]
                  %1220 = vst [vmem:[%s1212 + $0xc] sm:%s1202] %v1219
                  %v1221 = vld [vmem:[%s1211 + $0x10] sm:%s1202]
                  %1222 = vst [vmem:[%s1212 + $0x10] sm:%s1202] %v1221
                  %v1223 = vld [vmem:[%s1211 + $0x14] sm:%s1202]
                  %1224 = vst [vmem:[%s1212 + $0x14] sm:%s1202] %v1223
                  %v1225 = vld [vmem:[%s1211 + $0x18] sm:%s1202]
                  %1226 = vst [vmem:[%s1212 + $0x18] sm:%s1202] %v1225
                  %v1227 = vld [vmem:[%s1211 + $0x1c] sm:%s1202]
                  %1228 = vst [vmem:[%s1212 + $0x1c] sm:%s1202] %v1227
                  %v1229 = vld [vmem:[%s1211 + $0x20] sm:%s1202]
                  %1230 = vst [vmem:[%s1212 + $0x20] sm:%s1202] %v1229
                  %v1231 = vld [vmem:[%s1211 + $0x24] sm:%s1202]
                  %1232 = vst [vmem:[%s1212 + $0x24] sm:%s1202] %v1231
                  %v1233 = vld [vmem:[%s1211 + $0x28] sm:%s1202]
                  %1234 = vst [vmem:[%s1212 + $0x28] sm:%s1202] %v1233
                  %v1235 = vld [vmem:[%s1211 + $0x2c] sm:%s1202]
                  %1236 = vst [vmem:[%s1212 + $0x2c] sm:%s1202] %v1235
                  %v1237 = vld [vmem:[%s1211 + $0x30] sm:%s1202]
                  %1238 = vst [vmem:[%s1212 + $0x30] sm:%s1202] %v1237
                  %v1239 = vld [vmem:[%s1211 + $0x34] sm:%s1202]
                  %1240 = vst [vmem:[%s1212 + $0x34] sm:%s1202] %v1239
                  %v1241 = vld [vmem:[%s1211 + $0x38] sm:%s1202]
                  %1242 = vst [vmem:[%s1212 + $0x38] sm:%s1202] %v1241
                  %v1243 = vld [vmem:[%s1211 + $0x3c] sm:%s1202]
                  %1244 = vst [vmem:[%s1212 + $0x3c] sm:%s1202] %v1243
                  %v1245 = vld [vmem:[%s1211 + $0x40] sm:%s1202]
                  %1246 = vst [vmem:[%s1212 + $0x40] sm:%s1202] %v1245
                  %v1247 = vld [vmem:[%s1211 + $0x44] sm:%s1202]
                  %1248 = vst [vmem:[%s1212 + $0x44] sm:%s1202] %v1247
                  %v1249 = vld [vmem:[%s1211 + $0x48] sm:%s1202]
                  %1250 = vst [vmem:[%s1212 + $0x48] sm:%s1202] %v1249
                  %v1251 = vld [vmem:[%s1211 + $0x4c] sm:%s1202]
                  %1252 = vst [vmem:[%s1212 + $0x4c] sm:%s1202] %v1251
                  %v1253 = vld [vmem:[%s1211 + $0x50] sm:%s1202]
                  %1254 = vst [vmem:[%s1212 + $0x50] sm:%s1202] %v1253
                  %v1255 = vld [vmem:[%s1211 + $0x54] sm:%s1202]
                  %1256 = vst [vmem:[%s1212 + $0x54] sm:%s1202] %v1255
                  %v1257 = vld [vmem:[%s1211 + $0x58] sm:%s1202]
                  %1258 = vst [vmem:[%s1212 + $0x58] sm:%s1202] %v1257
                  %v1259 = vld [vmem:[%s1211 + $0x5c] sm:%s1202]
                  %1260 = vst [vmem:[%s1212 + $0x5c] sm:%s1202] %v1259
                  %v1261 = vld [vmem:[%s1211 + $0x60] sm:%s1202]
                  %1262 = vst [vmem:[%s1212 + $0x60] sm:%s1202] %v1261
                  %v1263 = vld [vmem:[%s1211 + $0x64] sm:%s1202]
                  %1264 = vst [vmem:[%s1212 + $0x64] sm:%s1202] %v1263
                  %v1265 = vld [vmem:[%s1211 + $0x68] sm:%s1202]
                  %1266 = vst [vmem:[%s1212 + $0x68] sm:%s1202] %v1265
                  %v1267 = vld [vmem:[%s1211 + $0x6c] sm:%s1202]
                  %1268 = vst [vmem:[%s1212 + $0x6c] sm:%s1202] %v1267
                  %v1269 = vld [vmem:[%s1211 + $0x70] sm:%s1202]
                  %1270 = vst [vmem:[%s1212 + $0x70] sm:%s1202] %v1269
                  %v1271 = vld [vmem:[%s1211 + $0x74] sm:%s1202]
                  %1272 = vst [vmem:[%s1212 + $0x74] sm:%s1202] %v1271
                  %v1273 = vld [vmem:[%s1211 + $0x78] sm:%s1202]
                  %1274 = vst [vmem:[%s1212 + $0x78] sm:%s1202] %v1273
                  %v1275 = vld [vmem:[%s1211 + $0x7c] sm:%s1202]
                  %1276 = vst [vmem:[%s1212 + $0x7c] sm:%s1202] %v1275
                  %s1277 = sadd.s32 1, %s1210
                  %p1278 = scmp.ge.s32.totalorder %s1277, %s1203
                  %s1279 = scalar_select %p1278, 0, %s1277
                  %s1280 = smul.u32 %s1279, 128
                  %s1281 = smul.u32 %s1279, 128
                  %s1282 = scalar_lea.vmem %s1071, %s1280 [#allocation2]
                  %s1283 = scalar_lea.vmem %s1083, %s1281
                $region71: #{matmul_bias_act.1} parent=65 // loop_footer
                  %s1207 = sadd.s32 %s1205, 1
                $region72: #{matmul_bias_act.1} parent=65 // loop_footer_branch
                  %1204 = sbr.rel target = $region68
                $region73: #{matmul_bias_act.1} parent=65 // loop_exit
                  _
                %s1284 = sshrl.u32 %s1078, 5
                %s1285 = sand.u32 %s1078, 31
                %s1286 = smul.u32 %s1284, 32
                %s1287 = smul.u32 4, %s1286
                %s1288 = scalar_lea.vmem %s1071, %s1287 [#allocation2]
                %s1289 = smul.u32 4, %s1286
                %s1290 = scalar_lea.vmem %s1083, %s1289
                // While loop
                $region74: #{matmul_bias_act.1} parent=65 // loop_pre_header
                  _
                $region75: #{matmul_bias_act.1} parent=65 // loop_header
                  %s1292 = sphi 0, %s1294
                  %p1293 = scmp.ge.s32.totalorder %s1292, %s1285
                  %s1297 = sphi 0, %s1304
                  %s1298 = sphi %s1288, %s1307
                  %s1299 = sphi %s1290, %s1308
                $region76: #{matmul_bias_act.1} parent=65 // loop_header_branch
                  %1296 = sbr.rel (%p1293) target = $region80
                $region77: #{matmul_bias_act.1} parent=65 // loop_body
                  %v1300 = vld [vmem:[%s1298] sm:%s1202]
                  %1301 = vst [vmem:[%s1299] sm:%s1202] %v1300
                  %s1302 = sadd.s32 1, %s1297
                  %p1303 = scmp.ge.s32.totalorder %s1302, %s1285
                  %s1304 = scalar_select %p1303, 0, %s1302
                  %s1305 = smul.u32 %s1304, 4
                  %s1306 = smul.u32 %s1304, 4
                  %s1307 = scalar_lea.vmem %s1288, %s1305 [#allocation2]
                  %s1308 = scalar_lea.vmem %s1290, %s1306
                $region78: #{matmul_bias_act.1} parent=65 // loop_footer
                  %s1294 = sadd.s32 %s1292, 1
                $region79: #{matmul_bias_act.1} parent=65 // loop_footer_branch
                  %1291 = sbr.rel target = $region75
                $region80: #{matmul_bias_act.1} parent=65 // loop_exit
                  _
              $region66: #{matmul_bias_act.1} parent=43 // pred_fallthru
                _
            $region44: #{matmul_bias_act.1} parent=39 // pred_fallthru
              _
            // Predicated region
            $region45: #{matmul_bias_act.1} parent=39 // pred_check
              _
            $region46: #{matmul_bias_act.1} parent=39 // pred_check_branch
              %1090 = sbr.rel (0) target = $region48
            $region47: #{matmul_bias_act.1} parent=39 // pred_region
              %s1092 = ssub.s32 16, 1
              %s1093 = sshrl.u32 %s1078, 5
              // While loop
              $region49: #{matmul_bias_act.1} parent=47 // loop_pre_header
                _
              $region50: #{matmul_bias_act.1} parent=47 // loop_header
                %s1095 = sphi 0, %s1097
                %p1096 = scmp.ge.s32.totalorder %s1095, %s1093
                %s1100 = sphi 0, %s1169
                %s1101 = sphi %s1071, %s1172
                %s1102 = sphi %s1083, %s1173
              $region51: #{matmul_bias_act.1} parent=47 // loop_header_branch
                %1099 = sbr.rel (%p1096) target = $region55
              $region52: #{matmul_bias_act.1} parent=47 // loop_body
                %v1103 = vld [vmem:[%s1101] sm:%s1092]
                %1104 = vst [vmem:[%s1102] sm:%s1092] %v1103
                %v1105 = vld [vmem:[%s1101 + $0x4] sm:%s1092]
                %1106 = vst [vmem:[%s1102 + $0x4] sm:%s1092] %v1105
                %v1107 = vld [vmem:[%s1101 + $0x8] sm:%s1092]
                %1108 = vst [vmem:[%s1102 + $0x8] sm:%s1092] %v1107
                %v1109 = vld [vmem:[%s1101 + $0xc] sm:%s1092]
                %1110 = vst [vmem:[%s1102 + $0xc] sm:%s1092] %v1109
                %v1111 = vld [vmem:[%s1101 + $0x10] sm:%s1092]
                %1112 = vst [vmem:[%s1102 + $0x10] sm:%s1092] %v1111
                %v1113 = vld [vmem:[%s1101 + $0x14] sm:%s1092]
                %1114 = vst [vmem:[%s1102 + $0x14] sm:%s1092] %v1113
                %v1115 = vld [vmem:[%s1101 + $0x18] sm:%s1092]
                %1116 = vst [vmem:[%s1102 + $0x18] sm:%s1092] %v1115
                %v1117 = vld [vmem:[%s1101 + $0x1c] sm:%s1092]
                %1118 = vst [vmem:[%s1102 + $0x1c] sm:%s1092] %v1117
                %v1119 = vld [vmem:[%s1101 + $0x20] sm:%s1092]
                %1120 = vst [vmem:[%s1102 + $0x20] sm:%s1092] %v1119
                %v1121 = vld [vmem:[%s1101 + $0x24] sm:%s1092]
                %1122 = vst [vmem:[%s1102 + $0x24] sm:%s1092] %v1121
                %v1123 = vld [vmem:[%s1101 + $0x28] sm:%s1092]
                %1124 = vst [vmem:[%s1102 + $0x28] sm:%s1092] %v1123
                %v1125 = vld [vmem:[%s1101 + $0x2c] sm:%s1092]
                %1126 = vst [vmem:[%s1102 + $0x2c] sm:%s1092] %v1125
                %v1127 = vld [vmem:[%s1101 + $0x30] sm:%s1092]
                %1128 = vst [vmem:[%s1102 + $0x30] sm:%s1092] %v1127
                %v1129 = vld [vmem:[%s1101 + $0x34] sm:%s1092]
                %1130 = vst [vmem:[%s1102 + $0x34] sm:%s1092] %v1129
                %v1131 = vld [vmem:[%s1101 + $0x38] sm:%s1092]
                %1132 = vst [vmem:[%s1102 + $0x38] sm:%s1092] %v1131
                %v1133 = vld [vmem:[%s1101 + $0x3c] sm:%s1092]
                %1134 = vst [vmem:[%s1102 + $0x3c] sm:%s1092] %v1133
                %v1135 = vld [vmem:[%s1101 + $0x40] sm:%s1092]
                %1136 = vst [vmem:[%s1102 + $0x40] sm:%s1092] %v1135
                %v1137 = vld [vmem:[%s1101 + $0x44] sm:%s1092]
                %1138 = vst [vmem:[%s1102 + $0x44] sm:%s1092] %v1137
                %v1139 = vld [vmem:[%s1101 + $0x48] sm:%s1092]
                %1140 = vst [vmem:[%s1102 + $0x48] sm:%s1092] %v1139
                %v1141 = vld [vmem:[%s1101 + $0x4c] sm:%s1092]
                %1142 = vst [vmem:[%s1102 + $0x4c] sm:%s1092] %v1141
                %v1143 = vld [vmem:[%s1101 + $0x50] sm:%s1092]
                %1144 = vst [vmem:[%s1102 + $0x50] sm:%s1092] %v1143
                %v1145 = vld [vmem:[%s1101 + $0x54] sm:%s1092]
                %1146 = vst [vmem:[%s1102 + $0x54] sm:%s1092] %v1145
                %v1147 = vld [vmem:[%s1101 + $0x58] sm:%s1092]
                %1148 = vst [vmem:[%s1102 + $0x58] sm:%s1092] %v1147
                %v1149 = vld [vmem:[%s1101 + $0x5c] sm:%s1092]
                %1150 = vst [vmem:[%s1102 + $0x5c] sm:%s1092] %v1149
                %v1151 = vld [vmem:[%s1101 + $0x60] sm:%s1092]
                %1152 = vst [vmem:[%s1102 + $0x60] sm:%s1092] %v1151
                %v1153 = vld [vmem:[%s1101 + $0x64] sm:%s1092]
                %1154 = vst [vmem:[%s1102 + $0x64] sm:%s1092] %v1153
                %v1155 = vld [vmem:[%s1101 + $0x68] sm:%s1092]
                %1156 = vst [vmem:[%s1102 + $0x68] sm:%s1092] %v1155
                %v1157 = vld [vmem:[%s1101 + $0x6c] sm:%s1092]
                %1158 = vst [vmem:[%s1102 + $0x6c] sm:%s1092] %v1157
                %v1159 = vld [vmem:[%s1101 + $0x70] sm:%s1092]
                %1160 = vst [vmem:[%s1102 + $0x70] sm:%s1092] %v1159
                %v1161 = vld [vmem:[%s1101 + $0x74] sm:%s1092]
                %1162 = vst [vmem:[%s1102 + $0x74] sm:%s1092] %v1161
                %v1163 = vld [vmem:[%s1101 + $0x78] sm:%s1092]
                %1164 = vst [vmem:[%s1102 + $0x78] sm:%s1092] %v1163
                %v1165 = vld [vmem:[%s1101 + $0x7c] sm:%s1092]
                %1166 = vst [vmem:[%s1102 + $0x7c] sm:%s1092] %v1165
                %s1167 = sadd.s32 1, %s1100
                %p1168 = scmp.ge.s32.totalorder %s1167, %s1093
                %s1169 = scalar_select %p1168, 0, %s1167
                %s1170 = smul.u32 %s1169, 128
                %s1171 = smul.u32 %s1169, 128
                %s1172 = scalar_lea.vmem %s1071, %s1170 [#allocation2]
                %s1173 = scalar_lea.vmem %s1083, %s1171
              $region53: #{matmul_bias_act.1} parent=47 // loop_footer
                %s1097 = sadd.s32 %s1095, 1
              $region54: #{matmul_bias_act.1} parent=47 // loop_footer_branch
                %1094 = sbr.rel target = $region50
              $region55: #{matmul_bias_act.1} parent=47 // loop_exit
                _
              %s1174 = sshrl.u32 %s1078, 5
              %s1175 = sand.u32 %s1078, 31
              %s1176 = smul.u32 %s1174, 32
              %s1177 = smul.u32 4, %s1176
              %s1178 = scalar_lea.vmem %s1071, %s1177 [#allocation2]
              %s1179 = smul.u32 4, %s1176
              %s1180 = scalar_lea.vmem %s1083, %s1179
              // While loop
              $region56: #{matmul_bias_act.1} parent=47 // loop_pre_header
                _
              $region57: #{matmul_bias_act.1} parent=47 // loop_header
                %s1182 = sphi 0, %s1184
                %p1183 = scmp.ge.s32.totalorder %s1182, %s1175
                %s1187 = sphi 0, %s1194
                %s1188 = sphi %s1178, %s1197
                %s1189 = sphi %s1180, %s1198
              $region58: #{matmul_bias_act.1} parent=47 // loop_header_branch
                %1186 = sbr.rel (%p1183) target = $region62
              $region59: #{matmul_bias_act.1} parent=47 // loop_body
                %v1190 = vld [vmem:[%s1188] sm:%s1092]
                %1191 = vst [vmem:[%s1189] sm:%s1092] %v1190
                %s1192 = sadd.s32 1, %s1187
                %p1193 = scmp.ge.s32.totalorder %s1192, %s1175
                %s1194 = scalar_select %p1193, 0, %s1192
                %s1195 = smul.u32 %s1194, 4
                %s1196 = smul.u32 %s1194, 4
                %s1197 = scalar_lea.vmem %s1178, %s1195 [#allocation2]
                %s1198 = scalar_lea.vmem %s1180, %s1196
              $region60: #{matmul_bias_act.1} parent=47 // loop_footer
                %s1184 = sadd.s32 %s1182, 1
              $region61: #{matmul_bias_act.1} parent=47 // loop_footer_branch
                %1181 = sbr.rel target = $region57
              $region62: #{matmul_bias_act.1} parent=47 // loop_exit
                _
            $region48: #{matmul_bias_act.1} parent=39 // pred_fallthru
              _
          $region40: #{matmul_bias_act.1} parent=35 // pred_fallthru
            _
          %1309 = vnop
        $region36: #{matmul_bias_act.1} parent=31 // pred_fallthru
          _
      $region32: #{matmul_bias_act.1} parent=5 // pred_fallthru
        _
      %p1310 = scmp.le.s32.totalorder 2, %s9
      // Predicated region
      $region81: #{matmul_bias_act.1} parent=5 // pred_check
        %p1311 = pneg %p1310
      $region82: #{matmul_bias_act.1} parent=5 // pred_check_branch
        %1313 = sbr.rel (%p1311) target = $region84
      $region83: #{matmul_bias_act.1} parent=5 // pred_region
        %s1314 = ssub.s32 %s9, 2
        // Predicated region
        $region85: #{matmul_bias_act.1} parent=83 // pred_check
          %p1315 = pneg %p130
        $region86: #{matmul_bias_act.1} parent=83 // pred_check_branch
          %1317 = sbr.rel (%p1315) target = $region88
        $region87: #{matmul_bias_act.1} parent=83 // pred_region
          %s1318 = sand.u32 %s115, 1
          %s1319 = sand.u32 %s115, 1
          %s1320 = smul.addr %s1319, 256
          %s1321 = scalar_lea.vmem [#allocation2], %s1320
        $region88: #{matmul_bias_act.1} parent=83 // pred_fallthru
          _
      $region84: #{matmul_bias_act.1} parent=5 // pred_fallthru
        _
    $region6: #{matmul_bias_act.1} parent=1 // loop_footer
      %s13 = sadd.s32 1, %s9
    $region7: #{matmul_bias_act.1} parent=1 // loop_footer_branch
      %8 = sbr.rel target = $region3
    $region8: #{matmul_bias_act.1} parent=1 // loop_exit
      _

</llo_original>
